<compile_context>
chip_gen: v5e
topology: v5e:2x2
jax: 0.10.0
libtpu: 0.0.40
codegen_flags: <defaults>
</compile_context>

<pallas_src>
import functools

import jax
import jax.numpy as jnp
from jax.experimental import pallas as pl
from jax.experimental.pallas import tpu as pltpu


# --------------------------------------------------------------------------- #
# Fused kernel: LSTM recurrence (PyTorch gate order i, f, g, o) + VAE head
#   relu(h_T) -> fc2/fc3 -> reparameterize(mu, logvar, eps) -> relu(fc4)
#   -> sigmoid(fc5)
# --------------------------------------------------------------------------- #
def _fbvae_kernel(x_ref,            # (T*B, M)  time-major, flattened
                  wih_ref,          # (4, M, H) per-gate input weights
                  whh_ref,          # (4, H, H) per-gate recurrent weights
                  bg_ref,           # (4, 1, H) per-gate combined bias
                  w2_ref, b2_ref,   # (H, Z), (1, Z)
                  w3_ref, b3_ref,   # (H, Z), (1, Z)
                  w4_ref, b4_ref,   # (Z, H), (1, H)
                  w5_ref, b5_ref,   # (H, M), (1, M)
                  eps_ref,          # (B, Z)
                  xrec_ref, mu_ref, logvar_ref,   # outputs
                  xw_sc,            # scratch (4, T*B, H)
                  *, win_len):
    T = win_len
    B = eps_ref.shape[0]
    H = whh_ref.shape[1]

    # --- Hoisted input projection: one batched matmul per gate, off the serial
    #     critical path.  Bias is folded in here (single broadcast).
    x_all = x_ref[...]                                           # (T*B, M)
    for k in range(4):                                           # static unroll
        xw_sc[k] = (jnp.dot(x_all, wih_ref[k],
                            preferred_element_type=jnp.float32)
                    + bg_ref[k])                                  # (T*B, H)

    # --- Load recurrent weights once, already per-gate (no in-loop slicing).
    whh_i = whh_ref[0]
    whh_f = whh_ref[1]
    whh_g = whh_ref[2]
    whh_o = whh_ref[3]

    def step(t, carry):
        h_prev, c_prev = carry
        row = pl.multiple_of(t * B, B)
        i_g = jax.nn.sigmoid(
            xw_sc[0, pl.ds(row, B), :]
            + jnp.dot(h_prev, whh_i, preferred_element_type=jnp.float32))
        f_g = jax.nn.sigmoid(
            xw_sc[1, pl.ds(row, B), :]
            + jnp.dot(h_prev, whh_f, preferred_element_type=jnp.float32))
        g_g = jnp.tanh(
            xw_sc[2, pl.ds(row, B), :]
            + jnp.dot(h_prev, whh_g, preferred_element_type=jnp.float32))
        o_g = jax.nn.sigmoid(
            xw_sc[3, pl.ds(row, B), :]
            + jnp.dot(h_prev, whh_o, preferred_element_type=jnp.float32))
        c_new = f_g * c_prev + i_g * g_g
        h_new = o_g * jnp.tanh(c_new)
        return h_new, c_new

    h0 = jnp.zeros((B, H), jnp.float32)
    c0 = jnp.zeros((B, H), jnp.float32)
    h_last, _ = jax.lax.fori_loop(0, T, step, (h0, c0), unroll=True)

    # --- Fused VAE head (everything stays VMEM-resident).
    hr = jnp.maximum(h_last, 0.0)                                       # relu
    mu = jnp.dot(hr, w2_ref[...], preferred_element_type=jnp.float32) + b2_ref[...]
    logvar = jnp.dot(hr, w3_ref[...], preferred_element_type=jnp.float32) + b3_ref[...]
    z = mu + eps_ref[...] * jnp.exp(logvar * 0.5)                       # reparameterize
    hd = jnp.maximum(
        jnp.dot(z, w4_ref[...], preferred_element_type=jnp.float32) + b4_ref[...], 0.0)
    xr = jax.nn.sigmoid(
        jnp.dot(hd, w5_ref[...], preferred_element_type=jnp.float32) + b5_ref[...])

    xrec_ref[...] = xr
    mu_ref[...] = mu
    logvar_ref[...] = logvar


# --------------------------------------------------------------------------- #
# Forward wrapper (layout plumbing only: transpose/reshape/per-gate split).
# --------------------------------------------------------------------------- #
@jax.jit
def fbvae_forward(x_btm, params, eps):
    """x_btm: (B, win_len, num_metric) -- same layout as the PyTorch module."""
    B, T, M = x_btm.shape
    H = params["w_hh"].shape[0]
    Z = params["w2"].shape[1]

    # Time-major, flattened for the batched input projection: (T*B, M).
    x_flat = jnp.transpose(x_btm, (1, 0, 2)).reshape(T * B, M)

    # Split LSTM params per gate (PyTorch order i, f, g, o) -> (4, in, H).
    wih_g = params["w_ih"].reshape(M, 4, H).transpose(1, 0, 2)   # (4, M, H)
    whh_g = params["w_hh"].reshape(H, 4, H).transpose(1, 0, 2)   # (4, H, H)
    b_g = params["b_lstm"].reshape(1, 4, H).transpose(1, 0, 2)   # (4, 1, H)

    kernel = functools.partial(_fbvae_kernel, win_len=T)
    return pl.pallas_call(
        kernel,
        out_shape=(
            jax.ShapeDtypeStruct((B, M), jnp.float32),   # x_reconst
            jax.ShapeDtypeStruct((B, Z), jnp.float32),   # mu
            jax.ShapeDtypeStruct((B, Z), jnp.float32),   # log_var
        ),
        scratch_shapes=[pltpu.VMEM((4, T * B, H), jnp.float32)],
    )(x_flat, wih_g, whh_g, b_g,
      params["w2"], params["b2"], params["w3"], params["b3"],
      params["w4"], params["b4"], params["w5"], params["b5"], eps)


# --------------------------------------------------------------------------- #
# Parameter init (PyTorch-like uniform init; weights stored as (in, out)).
# --------------------------------------------------------------------------- #
def init_params(key, num_metric, h_dim, z_dim):
    ks = jax.random.split(key, 12)

    def u(k, shape, fan_in):
        bound = 1.0 / jnp.sqrt(fan_in)
        return jax.random.uniform(k, shape, jnp.float32, -bound, bound)

    p = {}
    # LSTM: PyTorch shapes are (4H, M)/(4H, H); store transposed for x @ W.
    p["w_ih"] = u(ks[0], (num_metric, 4 * h_dim), h_dim)
    p["w_hh"] = u(ks[1], (h_dim, 4 * h_dim), h_dim)
    b_ih = u(ks[2], (1, 4 * h_dim), h_dim)
    b_hh = u(ks[3], (1, 4 * h_dim), h_dim)
    p["b_lstm"] = b_ih + b_hh
    # Linear layers, stored as (in, out).
    p["w2"] = u(ks[4], (h_dim, z_dim), h_dim); p["b2"] = u(ks[5], (1, z_dim), h_dim)
    p["w3"] = u(ks[6], (h_dim, z_dim), h_dim); p["b3"] = u(ks[7], (1, z_dim), h_dim)
    p["w4"] = u(ks[8], (z_dim, h_dim), z_dim); p["b4"] = u(ks[9], (1, h_dim), z_dim)
    p["w5"] = u(ks[10], (h_dim, num_metric), h_dim); p["b5"] = u(ks[11], (1, num_metric), h_dim)
    return p


# --------------------------------------------------------------------------- #
# Pure-JAX reference of the same forward (correctness check).
# --------------------------------------------------------------------------- #
def fbvae_reference(x_btm, params, eps):
    B, T, M = x_btm.shape
    H = params["w_hh"].shape[0]
    h = jnp.zeros((B, H), jnp.float32)
    c = jnp.zeros((B, H), jnp.float32)

    def step(carry, x_t):
        h, c = carry
        gates = x_t @ params["w_ih"] + h @ params["w_hh"] + params["b_lstm"]
        i = jax.nn.sigmoid(gates[:, :H])
        f = jax.nn.sigmoid(gates[:, H:2 * H])
        g = jnp.tanh(gates[:, 2 * H:3 * H])
        o = jax.nn.sigmoid(gates[:, 3 * H:])
        c = f * c + i * g
        h = o * jnp.tanh(c)
        return (h, c), None

    (h, _), _ = jax.lax.scan(step, (h, c), jnp.transpose(x_btm, (1, 0, 2)))
    hr = jnp.maximum(h, 0.0)
    mu = hr @ params["w2"] + params["b2"]
    logvar = hr @ params["w3"] + params["b3"]
    z = mu + eps * jnp.exp(logvar / 2)
    hd = jnp.maximum(z @ params["w4"] + params["b4"], 0.0)
    xr = jax.nn.sigmoid(hd @ params["w5"] + params["b5"])
    return xr, mu, logvar


if __name__ == "__main__":
    # batch, win_len, num_metric, h_dim, z_dim (small, sublane-filling batch)
    B, T, M, H, Z = 8, 8, 4, 32, 16

    key = jax.random.PRNGKey(0)
    k_x, k_eps, k_p = jax.random.split(key, 3)

    x = jax.random.uniform(k_x, (B, T, M), jnp.float32)     # (B, win_len, num_metric)
    eps = jax.random.normal(k_eps, (B, Z), jnp.float32)     # reparameterization noise
    params = init_params(k_p, M, H, Z)

    x_rec, mu, log_var = jax.block_until_ready(fbvae_forward(x, params, eps))
    x_rec_r, mu_r, log_var_r = fbvae_reference(x, params, eps)

    assert x_rec.shape == (B, M) and mu.shape == (B, Z) and log_var.shape == (B, Z)
    assert jnp.allclose(x_rec, x_rec_r, atol=1e-4)
    assert jnp.allclose(mu, mu_r, atol=1e-4)
    assert jnp.allclose(log_var, log_var_r, atol=1e-4)

    print("KERNEL_OK")
</pallas_src>

<mosaic_0001>
module attributes {stable_mosaic.version = 11 : i64} {
  func.func @_fbvae_kernel(%arg0: memref<64x4xf32, #tpu.memory_space<vmem>>, %arg1: memref<4x4x32xf32, #tpu.memory_space<vmem>>, %arg2: memref<4x32x32xf32, #tpu.memory_space<vmem>>, %arg3: memref<4x1x32xf32, #tpu.memory_space<vmem>>, %arg4: memref<32x16xf32, #tpu.memory_space<vmem>>, %arg5: memref<1x16xf32, #tpu.memory_space<vmem>>, %arg6: memref<32x16xf32, #tpu.memory_space<vmem>>, %arg7: memref<1x16xf32, #tpu.memory_space<vmem>>, %arg8: memref<16x32xf32, #tpu.memory_space<vmem>>, %arg9: memref<1x32xf32, #tpu.memory_space<vmem>>, %arg10: memref<32x4xf32, #tpu.memory_space<vmem>>, %arg11: memref<1x4xf32, #tpu.memory_space<vmem>>, %arg12: memref<8x16xf32, #tpu.memory_space<vmem>>, %arg13: memref<8x4xf32, #tpu.memory_space<vmem>>, %arg14: memref<8x16xf32, #tpu.memory_space<vmem>>, %arg15: memref<8x16xf32, #tpu.memory_space<vmem>>, %arg16: memref<4x64x32xf32, #tpu.memory_space<vmem>>) attributes {dimension_semantics = [], scalar_prefetch = 0 : i64, scratch_operands = 1 : i64, tpu.core_type = #tpu.core_type<tc>} {
    %c0 = arith.constant 0 : index
    %c0_0 = arith.constant 0 : index
    %0 = vector.load %arg0[%c0, %c0_0] : memref<64x4xf32, #tpu.memory_space<vmem>>, vector<64x4xf32>
    %c0_1 = arith.constant 0 : index
    %c0_2 = arith.constant 0 : index
    %c0_3 = arith.constant 0 : index
    %1 = vector.load %arg1[%c0_1, %c0_2, %c0_3] : memref<4x4x32xf32, #tpu.memory_space<vmem>>, vector<1x4x32xf32>
    %2 = vector.shape_cast %1 : vector<1x4x32xf32> to vector<4x32xf32>
    %cst = arith.constant dense<0.000000e+00> : vector<64x32xf32>
    %3 = tpu.matmul %0, %2, %cst {dimension_numbers = #tpu.dot_dimension_numbers<[1], [0], [0], [1], [0, 0, 1, 1], [], []>} : vector<64x4xf32>, vector<4x32xf32>, vector<64x32xf32> -> vector<64x32xf32>
    %c0_4 = arith.constant 0 : index
    %c0_5 = arith.constant 0 : index
    %c0_6 = arith.constant 0 : index
    %4 = vector.load %arg3[%c0_4, %c0_5, %c0_6] : memref<4x1x32xf32, #tpu.memory_space<vmem>>, vector<1x1x32xf32>
    %5 = vector.shape_cast %4 : vector<1x1x32xf32> to vector<1x32xf32>
    %6 = vector.broadcast %5 : vector<1x32xf32> to vector<64x32xf32>
    %7 = arith.addf %3, %6 : vector<64x32xf32>
    %c0_7 = arith.constant 0 : index
    %c0_8 = arith.constant 0 : index
    %c0_9 = arith.constant 0 : index
    %8 = vector.load %arg16[%c0_7, %c0_8, %c0_9] : memref<4x64x32xf32, #tpu.memory_space<vmem>>, vector<1x64x32xf32>
    %9 = vector.shape_cast %8 : vector<1x64x32xf32> to vector<64x32xf32>
    %10 = vector.shape_cast %7 : vector<64x32xf32> to vector<1x64x32xf32>
    tpu.vector_store %arg16[%c0_7, %c0_8, %c0_9], %10 {strides = array<i32>} : memref<4x64x32xf32, #tpu.memory_space<vmem>>, vector<1x64x32xf32>,
    %c1 = arith.constant 1 : index
    %c0_10 = arith.constant 0 : index
    %c0_11 = arith.constant 0 : index
    %11 = vector.load %arg1[%c1, %c0_10, %c0_11] : memref<4x4x32xf32, #tpu.memory_space<vmem>>, vector<1x4x32xf32>
    %12 = vector.shape_cast %11 : vector<1x4x32xf32> to vector<4x32xf32>
    %cst_12 = arith.constant dense<0.000000e+00> : vector<64x32xf32>
    %13 = tpu.matmul %0, %12, %cst_12 {dimension_numbers = #tpu.dot_dimension_numbers<[1], [0], [0], [1], [0, 0, 1, 1], [], []>} : vector<64x4xf32>, vector<4x32xf32>, vector<64x32xf32> -> vector<64x32xf32>
    %c1_13 = arith.constant 1 : index
    %c0_14 = arith.constant 0 : index
    %c0_15 = arith.constant 0 : index
    %14 = vector.load %arg3[%c1_13, %c0_14, %c0_15] : memref<4x1x32xf32, #tpu.memory_space<vmem>>, vector<1x1x32xf32>
    %15 = vector.shape_cast %14 : vector<1x1x32xf32> to vector<1x32xf32>
    %16 = vector.broadcast %15 : vector<1x32xf32> to vector<64x32xf32>
    %17 = arith.addf %13, %16 : vector<64x32xf32>
    %c1_16 = arith.constant 1 : index
    %c0_17 = arith.constant 0 : index
    %c0_18 = arith.constant 0 : index
    %18 = vector.load %arg16[%c1_16, %c0_17, %c0_18] : memref<4x64x32xf32, #tpu.memory_space<vmem>>, vector<1x64x32xf32>
    %19 = vector.shape_cast %18 : vector<1x64x32xf32> to vector<64x32xf32>
    %20 = vector.shape_cast %17 : vector<64x32xf32> to vector<1x64x32xf32>
    tpu.vector_store %arg16[%c1_16, %c0_17, %c0_18], %20 {strides = array<i32>} : memref<4x64x32xf32, #tpu.memory_space<vmem>>, vector<1x64x32xf32>,
    %c2 = arith.constant 2 : index
    %c0_19 = arith.constant 0 : index
    %c0_20 = arith.constant 0 : index
    %21 = vector.load %arg1[%c2, %c0_19, %c0_20] : memref<4x4x32xf32, #tpu.memory_space<vmem>>, vector<1x4x32xf32>
    %22 = vector.shape_cast %21 : vector<1x4x32xf32> to vector<4x32xf32>
    %cst_21 = arith.constant dense<0.000000e+00> : vector<64x32xf32>
    %23 = tpu.matmul %0, %22, %cst_21 {dimension_numbers = #tpu.dot_dimension_numbers<[1], [0], [0], [1], [0, 0, 1, 1], [], []>} : vector<64x4xf32>, vector<4x32xf32>, vector<64x32xf32> -> vector<64x32xf32>
    %c2_22 = arith.constant 2 : index
    %c0_23 = arith.constant 0 : index
    %c0_24 = arith.constant 0 : index
    %24 = vector.load %arg3[%c2_22, %c0_23, %c0_24] : memref<4x1x32xf32, #tpu.memory_space<vmem>>, vector<1x1x32xf32>
    %25 = vector.shape_cast %24 : vector<1x1x32xf32> to vector<1x32xf32>
    %26 = vector.broadcast %25 : vector<1x32xf32> to vector<64x32xf32>
    %27 = arith.addf %23, %26 : vector<64x32xf32>
    %c2_25 = arith.constant 2 : index
    %c0_26 = arith.constant 0 : index
    %c0_27 = arith.constant 0 : index
    %28 = vector.load %arg16[%c2_25, %c0_26, %c0_27] : memref<4x64x32xf32, #tpu.memory_space<vmem>>, vector<1x64x32xf32>
    %29 = vector.shape_cast %28 : vector<1x64x32xf32> to vector<64x32xf32>
    %30 = vector.shape_cast %27 : vector<64x32xf32> to vector<1x64x32xf32>
    tpu.vector_store %arg16[%c2_25, %c0_26, %c0_27], %30 {strides = array<i32>} : memref<4x64x32xf32, #tpu.memory_space<vmem>>, vector<1x64x32xf32>,
    %c3 = arith.constant 3 : index
    %c0_28 = arith.constant 0 : index
    %c0_29 = arith.constant 0 : index
    %31 = vector.load %arg1[%c3, %c0_28, %c0_29] : memref<4x4x32xf32, #tpu.memory_space<vmem>>, vector<1x4x32xf32>
    %32 = vector.shape_cast %31 : vector<1x4x32xf32> to vector<4x32xf32>
    %cst_30 = arith.constant dense<0.000000e+00> : vector<64x32xf32>
    %33 = tpu.matmul %0, %32, %cst_30 {dimension_numbers = #tpu.dot_dimension_numbers<[1], [0], [0], [1], [0, 0, 1, 1], [], []>} : vector<64x4xf32>, vector<4x32xf32>, vector<64x32xf32> -> vector<64x32xf32>
    %c3_31 = arith.constant 3 : index
    %c0_32 = arith.constant 0 : index
    %c0_33 = arith.constant 0 : index
    %34 = vector.load %arg3[%c3_31, %c0_32, %c0_33] : memref<4x1x32xf32, #tpu.memory_space<vmem>>, vector<1x1x32xf32>
    %35 = vector.shape_cast %34 : vector<1x1x32xf32> to vector<1x32xf32>
    %36 = vector.broadcast %35 : vector<1x32xf32> to vector<64x32xf32>
    %37 = arith.addf %33, %36 : vector<64x32xf32>
    %c3_34 = arith.constant 3 : index
    %c0_35 = arith.constant 0 : index
    %c0_36 = arith.constant 0 : index
    %38 = vector.load %arg16[%c3_34, %c0_35, %c0_36] : memref<4x64x32xf32, #tpu.memory_space<vmem>>, vector<1x64x32xf32>
    %39 = vector.shape_cast %38 : vector<1x64x32xf32> to vector<64x32xf32>
    %40 = vector.shape_cast %37 : vector<64x32xf32> to vector<1x64x32xf32>
    tpu.vector_store %arg16[%c3_34, %c0_35, %c0_36], %40 {strides = array<i32>} : memref<4x64x32xf32, #tpu.memory_space<vmem>>, vector<1x64x32xf32>,
    %c0_37 = arith.constant 0 : index
    %c0_38 = arith.constant 0 : index
    %c0_39 = arith.constant 0 : index
    %41 = vector.load %arg2[%c0_37, %c0_38, %c0_39] : memref<4x32x32xf32, #tpu.memory_space<vmem>>, vector<1x32x32xf32>
    %42 = vector.shape_cast %41 : vector<1x32x32xf32> to vector<32x32xf32>
    %c1_40 = arith.constant 1 : index
    %c0_41 = arith.constant 0 : index
    %c0_42 = arith.constant 0 : index
    %43 = vector.load %arg2[%c1_40, %c0_41, %c0_42] : memref<4x32x32xf32, #tpu.memory_space<vmem>>, vector<1x32x32xf32>
    %44 = vector.shape_cast %43 : vector<1x32x32xf32> to vector<32x32xf32>
    %c2_43 = arith.constant 2 : index
    %c0_44 = arith.constant 0 : index
    %c0_45 = arith.constant 0 : index
    %45 = vector.load %arg2[%c2_43, %c0_44, %c0_45] : memref<4x32x32xf32, #tpu.memory_space<vmem>>, vector<1x32x32xf32>
    %46 = vector.shape_cast %45 : vector<1x32x32xf32> to vector<32x32xf32>
    %c3_46 = arith.constant 3 : index
    %c0_47 = arith.constant 0 : index
    %c0_48 = arith.constant 0 : index
    %47 = vector.load %arg2[%c3_46, %c0_47, %c0_48] : memref<4x32x32xf32, #tpu.memory_space<vmem>>, vector<1x32x32xf32>
    %48 = vector.shape_cast %47 : vector<1x32x32xf32> to vector<32x32xf32>
    %cst_49 = arith.constant 0.000000e+00 : f32
    %49 = vector.broadcast %cst_49 : f32 to vector<8x32xf32>
    %cst_50 = arith.constant 0.000000e+00 : f32
    %50 = vector.broadcast %cst_50 : f32 to vector<8x32xf32>
    %c0_i32 = arith.constant 0 : i32
    %c8_i32 = arith.constant 8 : i32
    %51 = arith.muli %c0_i32, %c8_i32 : i32
    %52 = tpu.assume_multiple %51, 8 : i32
    %c0_51 = arith.constant 0 : index
    %53 = arith.index_cast %52 : i32 to index
    %c0_52 = arith.constant 0 : index
    %54 = vector.load %arg16[%c0_51, %53, %c0_52] : memref<4x64x32xf32, #tpu.memory_space<vmem>>, vector<1x8x32xf32>
    %55 = vector.shape_cast %54 : vector<1x8x32xf32> to vector<8x32xf32>
    %cst_53 = arith.constant dense<0.000000e+00> : vector<8x32xf32>
    %56 = tpu.matmul %49, %42, %cst_53 {dimension_numbers = #tpu.dot_dimension_numbers<[1], [0], [0], [1], [0, 0, 1, 1], [], []>} : vector<8x32xf32>, vector<32x32xf32>, vector<8x32xf32> -> vector<8x32xf32>
    %57 = arith.addf %55, %56 : vector<8x32xf32>
    %58 = arith.negf %57 : vector<8x32xf32>
    %59 = math.exp %58 : vector<8x32xf32>
    %cst_54 = arith.constant 1.000000e+00 : f32
    %60 = vector.broadcast %cst_54 : f32 to vector<8x32xf32>
    %61 = arith.addf %60, %59 : vector<8x32xf32>
    %62 = arith.divf %60, %61 : vector<8x32xf32>
    %c1_55 = arith.constant 1 : index
    %63 = arith.index_cast %52 : i32 to index
    %c0_56 = arith.constant 0 : index
    %64 = vector.load %arg16[%c1_55, %63, %c0_56] : memref<4x64x32xf32, #tpu.memory_space<vmem>>, vector<1x8x32xf32>
    %65 = vector.shape_cast %64 : vector<1x8x32xf32> to vector<8x32xf32>
    %cst_57 = arith.constant dense<0.000000e+00> : vector<8x32xf32>
    %66 = tpu.matmul %49, %44, %cst_57 {dimension_numbers = #tpu.dot_dimension_numbers<[1], [0], [0], [1], [0, 0, 1, 1], [], []>} : vector<8x32xf32>, vector<32x32xf32>, vector<8x32xf32> -> vector<8x32xf32>
    %67 = arith.addf %65, %66 : vector<8x32xf32>
    %68 = arith.negf %67 : vector<8x32xf32>
    %69 = math.exp %68 : vector<8x32xf32>
    %cst_58 = arith.constant 1.000000e+00 : f32
    %70 = vector.broadcast %cst_58 : f32 to vector<8x32xf32>
    %71 = arith.addf %70, %69 : vector<8x32xf32>
    %72 = arith.divf %70, %71 : vector<8x32xf32>
    %c2_59 = arith.constant 2 : index
    %73 = arith.index_cast %52 : i32 to index
    %c0_60 = arith.constant 0 : index
    %74 = vector.load %arg16[%c2_59, %73, %c0_60] : memref<4x64x32xf32, #tpu.memory_space<vmem>>, vector<1x8x32xf32>
    %75 = vector.shape_cast %74 : vector<1x8x32xf32> to vector<8x32xf32>
    %cst_61 = arith.constant dense<0.000000e+00> : vector<8x32xf32>
    %76 = tpu.matmul %49, %46, %cst_61 {dimension_numbers = #tpu.dot_dimension_numbers<[1], [0], [0], [1], [0, 0, 1, 1], [], []>} : vector<8x32xf32>, vector<32x32xf32>, vector<8x32xf32> -> vector<8x32xf32>
    %77 = arith.addf %75, %76 : vector<8x32xf32>
    %78 = math.tanh %77 : vector<8x32xf32>
    %c3_62 = arith.constant 3 : index
    %79 = arith.index_cast %52 : i32 to index
    %c0_63 = arith.constant 0 : index
    %80 = vector.load %arg16[%c3_62, %79, %c0_63] : memref<4x64x32xf32, #tpu.memory_space<vmem>>, vector<1x8x32xf32>
    %81 = vector.shape_cast %80 : vector<1x8x32xf32> to vector<8x32xf32>
    %cst_64 = arith.constant dense<0.000000e+00> : vector<8x32xf32>
    %82 = tpu.matmul %49, %48, %cst_64 {dimension_numbers = #tpu.dot_dimension_numbers<[1], [0], [0], [1], [0, 0, 1, 1], [], []>} : vector<8x32xf32>, vector<32x32xf32>, vector<8x32xf32> -> vector<8x32xf32>
    %83 = arith.addf %81, %82 : vector<8x32xf32>
    %84 = arith.negf %83 : vector<8x32xf32>
    %85 = math.exp %84 : vector<8x32xf32>
    %cst_65 = arith.constant 1.000000e+00 : f32
    %86 = vector.broadcast %cst_65 : f32 to vector<8x32xf32>
    %87 = arith.addf %86, %85 : vector<8x32xf32>
    %88 = arith.divf %86, %87 : vector<8x32xf32>
    %89 = arith.mulf %72, %50 : vector<8x32xf32>
    %90 = arith.mulf %62, %78 : vector<8x32xf32>
    %91 = arith.addf %89, %90 : vector<8x32xf32>
    %92 = math.tanh %91 : vector<8x32xf32>
    %93 = arith.mulf %88, %92 : vector<8x32xf32>
    %c1_i32 = arith.constant 1 : i32
    %c8_i32_66 = arith.constant 8 : i32
    %94 = arith.muli %c1_i32, %c8_i32_66 : i32
    %95 = tpu.assume_multiple %94, 8 : i32
    %c0_67 = arith.constant 0 : index
    %96 = arith.index_cast %95 : i32 to index
    %c0_68 = arith.constant 0 : index
    %97 = vector.load %arg16[%c0_67, %96, %c0_68] : memref<4x64x32xf32, #tpu.memory_space<vmem>>, vector<1x8x32xf32>
    %98 = vector.shape_cast %97 : vector<1x8x32xf32> to vector<8x32xf32>
    %cst_69 = arith.constant dense<0.000000e+00> : vector<8x32xf32>
    %99 = tpu.matmul %93, %42, %cst_69 {dimension_numbers = #tpu.dot_dimension_numbers<[1], [0], [0], [1], [0, 0, 1, 1], [], []>} : vector<8x32xf32>, vector<32x32xf32>, vector<8x32xf32> -> vector<8x32xf32>
    %100 = arith.addf %98, %99 : vector<8x32xf32>
    %101 = arith.negf %100 : vector<8x32xf32>
    %102 = math.exp %101 : vector<8x32xf32>
    %cst_70 = arith.constant 1.000000e+00 : f32
    %103 = vector.broadcast %cst_70 : f32 to vector<8x32xf32>
    %104 = arith.addf %103, %102 : vector<8x32xf32>
    %105 = arith.divf %103, %104 : vector<8x32xf32>
    %c1_71 = arith.constant 1 : index
    %106 = arith.index_cast %95 : i32 to index
    %c0_72 = arith.constant 0 : index
    %107 = vector.load %arg16[%c1_71, %106, %c0_72] : memref<4x64x32xf32, #tpu.memory_space<vmem>>, vector<1x8x32xf32>
    %108 = vector.shape_cast %107 : vector<1x8x32xf32> to vector<8x32xf32>
    %cst_73 = arith.constant dense<0.000000e+00> : vector<8x32xf32>
    %109 = tpu.matmul %93, %44, %cst_73 {dimension_numbers = #tpu.dot_dimension_numbers<[1], [0], [0], [1], [0, 0, 1, 1], [], []>} : vector<8x32xf32>, vector<32x32xf32>, vector<8x32xf32> -> vector<8x32xf32>
    %110 = arith.addf %108, %109 : vector<8x32xf32>
    %111 = arith.negf %110 : vector<8x32xf32>
    %112 = math.exp %111 : vector<8x32xf32>
    %cst_74 = arith.constant 1.000000e+00 : f32
    %113 = vector.broadcast %cst_74 : f32 to vector<8x32xf32>
    %114 = arith.addf %113, %112 : vector<8x32xf32>
    %115 = arith.divf %113, %114 : vector<8x32xf32>
    %c2_75 = arith.constant 2 : index
    %116 = arith.index_cast %95 : i32 to index
    %c0_76 = arith.constant 0 : index
    %117 = vector.load %arg16[%c2_75, %116, %c0_76] : memref<4x64x32xf32, #tpu.memory_space<vmem>>, vector<1x8x32xf32>
    %118 = vector.shape_cast %117 : vector<1x8x32xf32> to vector<8x32xf32>
    %cst_77 = arith.constant dense<0.000000e+00> : vector<8x32xf32>
    %119 = tpu.matmul %93, %46, %cst_77 {dimension_numbers = #tpu.dot_dimension_numbers<[1], [0], [0], [1], [0, 0, 1, 1], [], []>} : vector<8x32xf32>, vector<32x32xf32>, vector<8x32xf32> -> vector<8x32xf32>
    %120 = arith.addf %118, %119 : vector<8x32xf32>
    %121 = math.tanh %120 : vector<8x32xf32>
    %c3_78 = arith.constant 3 : index
    %122 = arith.index_cast %95 : i32 to index
    %c0_79 = arith.constant 0 : index
    %123 = vector.load %arg16[%c3_78, %122, %c0_79] : memref<4x64x32xf32, #tpu.memory_space<vmem>>, vector<1x8x32xf32>
    %124 = vector.shape_cast %123 : vector<1x8x32xf32> to vector<8x32xf32>
    %cst_80 = arith.constant dense<0.000000e+00> : vector<8x32xf32>
    %125 = tpu.matmul %93, %48, %cst_80 {dimension_numbers = #tpu.dot_dimension_numbers<[1], [0], [0], [1], [0, 0, 1, 1], [], []>} : vector<8x32xf32>, vector<32x32xf32>, vector<8x32xf32> -> vector<8x32xf32>
    %126 = arith.addf %124, %125 : vector<8x32xf32>
    %127 = arith.negf %126 : vector<8x32xf32>
    %128 = math.exp %127 : vector<8x32xf32>
    %cst_81 = arith.constant 1.000000e+00 : f32
    %129 = vector.broadcast %cst_81 : f32 to vector<8x32xf32>
    %130 = arith.addf %129, %128 : vector<8x32xf32>
    %131 = arith.divf %129, %130 : vector<8x32xf32>
    %132 = arith.mulf %115, %91 : vector<8x32xf32>
    %133 = arith.mulf %105, %121 : vector<8x32xf32>
    %134 = arith.addf %132, %133 : vector<8x32xf32>
    %135 = math.tanh %134 : vector<8x32xf32>
    %136 = arith.mulf %131, %135 : vector<8x32xf32>
    %c2_i32 = arith.constant 2 : i32
    %c8_i32_82 = arith.constant 8 : i32
    %137 = arith.muli %c2_i32, %c8_i32_82 : i32
    %138 = tpu.assume_multiple %137, 8 : i32
    %c0_83 = arith.constant 0 : index
    %139 = arith.index_cast %138 : i32 to index
    %c0_84 = arith.constant 0 : index
    %140 = vector.load %arg16[%c0_83, %139, %c0_84] : memref<4x64x32xf32, #tpu.memory_space<vmem>>, vector<1x8x32xf32>
    %141 = vector.shape_cast %140 : vector<1x8x32xf32> to vector<8x32xf32>
    %cst_85 = arith.constant dense<0.000000e+00> : vector<8x32xf32>
    %142 = tpu.matmul %136, %42, %cst_85 {dimension_numbers = #tpu.dot_dimension_numbers<[1], [0], [0], [1], [0, 0, 1, 1], [], []>} : vector<8x32xf32>, vector<32x32xf32>, vector<8x32xf32> -> vector<8x32xf32>
    %143 = arith.addf %141, %142 : vector<8x32xf32>
    %144 = arith.negf %143 : vector<8x32xf32>
    %145 = math.exp %144 : vector<8x32xf32>
    %cst_86 = arith.constant 1.000000e+00 : f32
    %146 = vector.broadcast %cst_86 : f32 to vector<8x32xf32>
    %147 = arith.addf %146, %145 : vector<8x32xf32>
    %148 = arith.divf %146, %147 : vector<8x32xf32>
    %c1_87 = arith.constant 1 : index
    %149 = arith.index_cast %138 : i32 to index
    %c0_88 = arith.constant 0 : index
    %150 = vector.load %arg16[%c1_87, %149, %c0_88] : memref<4x64x32xf32, #tpu.memory_space<vmem>>, vector<1x8x32xf32>
    %151 = vector.shape_cast %150 : vector<1x8x32xf32> to vector<8x32xf32>
    %cst_89 = arith.constant dense<0.000000e+00> : vector<8x32xf32>
    %152 = tpu.matmul %136, %44, %cst_89 {dimension_numbers = #tpu.dot_dimension_numbers<[1], [0], [0], [1], [0, 0, 1, 1], [], []>} : vector<8x32xf32>, vector<32x32xf32>, vector<8x32xf32> -> vector<8x32xf32>
    %153 = arith.addf %151, %152 : vector<8x32xf32>
    %154 = arith.negf %153 : vector<8x32xf32>
    %155 = math.exp %154 : vector<8x32xf32>
    %cst_90 = arith.constant 1.000000e+00 : f32
    %156 = vector.broadcast %cst_90 : f32 to vector<8x32xf32>
    %157 = arith.addf %156, %155 : vector<8x32xf32>
    %158 = arith.divf %156, %157 : vector<8x32xf32>
    %c2_91 = arith.constant 2 : index
    %159 = arith.index_cast %138 : i32 to index
    %c0_92 = arith.constant 0 : index
    %160 = vector.load %arg16[%c2_91, %159, %c0_92] : memref<4x64x32xf32, #tpu.memory_space<vmem>>, vector<1x8x32xf32>
    %161 = vector.shape_cast %160 : vector<1x8x32xf32> to vector<8x32xf32>
    %cst_93 = arith.constant dense<0.000000e+00> : vector<8x32xf32>
    %162 = tpu.matmul %136, %46, %cst_93 {dimension_numbers = #tpu.dot_dimension_numbers<[1], [0], [0], [1], [0, 0, 1, 1], [], []>} : vector<8x32xf32>, vector<32x32xf32>, vector<8x32xf32> -> vector<8x32xf32>
    %163 = arith.addf %161, %162 : vector<8x32xf32>
    %164 = math.tanh %163 : vector<8x32xf32>
    %c3_94 = arith.constant 3 : index
    %165 = arith.index_cast %138 : i32 to index
    %c0_95 = arith.constant 0 : index
    %166 = vector.load %arg16[%c3_94, %165, %c0_95] : memref<4x64x32xf32, #tpu.memory_space<vmem>>, vector<1x8x32xf32>
    %167 = vector.shape_cast %166 : vector<1x8x32xf32> to vector<8x32xf32>
    %cst_96 = arith.constant dense<0.000000e+00> : vector<8x32xf32>
    %168 = tpu.matmul %136, %48, %cst_96 {dimension_numbers = #tpu.dot_dimension_numbers<[1], [0], [0], [1], [0, 0, 1, 1], [], []>} : vector<8x32xf32>, vector<32x32xf32>, vector<8x32xf32> -> vector<8x32xf32>
    %169 = arith.addf %167, %168 : vector<8x32xf32>
    %170 = arith.negf %169 : vector<8x32xf32>
    %171 = math.exp %170 : vector<8x32xf32>
    %cst_97 = arith.constant 1.000000e+00 : f32
    %172 = vector.broadcast %cst_97 : f32 to vector<8x32xf32>
    %173 = arith.addf %172, %171 : vector<8x32xf32>
    %174 = arith.divf %172, %173 : vector<8x32xf32>
    %175 = arith.mulf %158, %134 : vector<8x32xf32>
    %176 = arith.mulf %148, %164 : vector<8x32xf32>
    %177 = arith.addf %175, %176 : vector<8x32xf32>
    %178 = math.tanh %177 : vector<8x32xf32>
    %179 = arith.mulf %174, %178 : vector<8x32xf32>
    %c3_i32 = arith.constant 3 : i32
    %c8_i32_98 = arith.constant 8 : i32
    %180 = arith.muli %c3_i32, %c8_i32_98 : i32
    %181 = tpu.assume_multiple %180, 8 : i32
    %c0_99 = arith.constant 0 : index
    %182 = arith.index_cast %181 : i32 to index
    %c0_100 = arith.constant 0 : index
    %183 = vector.load %arg16[%c0_99, %182, %c0_100] : memref<4x64x32xf32, #tpu.memory_space<vmem>>, vector<1x8x32xf32>
    %184 = vector.shape_cast %183 : vector<1x8x32xf32> to vector<8x32xf32>
    %cst_101 = arith.constant dense<0.000000e+00> : vector<8x32xf32>
    %185 = tpu.matmul %179, %42, %cst_101 {dimension_numbers = #tpu.dot_dimension_numbers<[1], [0], [0], [1], [0, 0, 1, 1], [], []>} : vector<8x32xf32>, vector<32x32xf32>, vector<8x32xf32> -> vector<8x32xf32>
    %186 = arith.addf %184, %185 : vector<8x32xf32>
    %187 = arith.negf %186 : vector<8x32xf32>
    %188 = math.exp %187 : vector<8x32xf32>
    %cst_102 = arith.constant 1.000000e+00 : f32
    %189 = vector.broadcast %cst_102 : f32 to vector<8x32xf32>
    %190 = arith.addf %189, %188 : vector<8x32xf32>
    %191 = arith.divf %189, %190 : vector<8x32xf32>
    %c1_103 = arith.constant 1 : index
    %192 = arith.index_cast %181 : i32 to index
    %c0_104 = arith.constant 0 : index
    %193 = vector.load %arg16[%c1_103, %192, %c0_104] : memref<4x64x32xf32, #tpu.memory_space<vmem>>, vector<1x8x32xf32>
    %194 = vector.shape_cast %193 : vector<1x8x32xf32> to vector<8x32xf32>
    %cst_105 = arith.constant dense<0.000000e+00> : vector<8x32xf32>
    %195 = tpu.matmul %179, %44, %cst_105 {dimension_numbers = #tpu.dot_dimension_numbers<[1], [0], [0], [1], [0, 0, 1, 1], [], []>} : vector<8x32xf32>, vector<32x32xf32>, vector<8x32xf32> -> vector<8x32xf32>
    %196 = arith.addf %194, %195 : vector<8x32xf32>
    %197 = arith.negf %196 : vector<8x32xf32>
    %198 = math.exp %197 : vector<8x32xf32>
    %cst_106 = arith.constant 1.000000e+00 : f32
    %199 = vector.broadcast %cst_106 : f32 to vector<8x32xf32>
    %200 = arith.addf %199, %198 : vector<8x32xf32>
    %201 = arith.divf %199, %200 : vector<8x32xf32>
    %c2_107 = arith.constant 2 : index
    %202 = arith.index_cast %181 : i32 to index
    %c0_108 = arith.constant 0 : index
    %203 = vector.load %arg16[%c2_107, %202, %c0_108] : memref<4x64x32xf32, #tpu.memory_space<vmem>>, vector<1x8x32xf32>
    %204 = vector.shape_cast %203 : vector<1x8x32xf32> to vector<8x32xf32>
    %cst_109 = arith.constant dense<0.000000e+00> : vector<8x32xf32>
    %205 = tpu.matmul %179, %46, %cst_109 {dimension_numbers = #tpu.dot_dimension_numbers<[1], [0], [0], [1], [0, 0, 1, 1], [], []>} : vector<8x32xf32>, vector<32x32xf32>, vector<8x32xf32> -> vector<8x32xf32>
    %206 = arith.addf %204, %205 : vector<8x32xf32>
    %207 = math.tanh %206 : vector<8x32xf32>
    %c3_110 = arith.constant 3 : index
    %208 = arith.index_cast %181 : i32 to index
    %c0_111 = arith.constant 0 : index
    %209 = vector.load %arg16[%c3_110, %208, %c0_111] : memref<4x64x32xf32, #tpu.memory_space<vmem>>, vector<1x8x32xf32>
    %210 = vector.shape_cast %209 : vector<1x8x32xf32> to vector<8x32xf32>
    %cst_112 = arith.constant dense<0.000000e+00> : vector<8x32xf32>
    %211 = tpu.matmul %179, %48, %cst_112 {dimension_numbers = #tpu.dot_dimension_numbers<[1], [0], [0], [1], [0, 0, 1, 1], [], []>} : vector<8x32xf32>, vector<32x32xf32>, vector<8x32xf32> -> vector<8x32xf32>
    %212 = arith.addf %210, %211 : vector<8x32xf32>
    %213 = arith.negf %212 : vector<8x32xf32>
    %214 = math.exp %213 : vector<8x32xf32>
    %cst_113 = arith.constant 1.000000e+00 : f32
    %215 = vector.broadcast %cst_113 : f32 to vector<8x32xf32>
    %216 = arith.addf %215, %214 : vector<8x32xf32>
    %217 = arith.divf %215, %216 : vector<8x32xf32>
    %218 = arith.mulf %201, %177 : vector<8x32xf32>
    %219 = arith.mulf %191, %207 : vector<8x32xf32>
    %220 = arith.addf %218, %219 : vector<8x32xf32>
    %221 = math.tanh %220 : vector<8x32xf32>
    %222 = arith.mulf %217, %221 : vector<8x32xf32>
    %c4_i32 = arith.constant 4 : i32
    %c8_i32_114 = arith.constant 8 : i32
    %223 = arith.muli %c4_i32, %c8_i32_114 : i32
    %224 = tpu.assume_multiple %223, 8 : i32
    %c0_115 = arith.constant 0 : index
    %225 = arith.index_cast %224 : i32 to index
    %c0_116 = arith.constant 0 : index
    %226 = vector.load %arg16[%c0_115, %225, %c0_116] : memref<4x64x32xf32, #tpu.memory_space<vmem>>, vector<1x8x32xf32>
    %227 = vector.shape_cast %226 : vector<1x8x32xf32> to vector<8x32xf32>
    %cst_117 = arith.constant dense<0.000000e+00> : vector<8x32xf32>
    %228 = tpu.matmul %222, %42, %cst_117 {dimension_numbers = #tpu.dot_dimension_numbers<[1], [0], [0], [1], [0, 0, 1, 1], [], []>} : vector<8x32xf32>, vector<32x32xf32>, vector<8x32xf32> -> vector<8x32xf32>
    %229 = arith.addf %227, %228 : vector<8x32xf32>
    %230 = arith.negf %229 : vector<8x32xf32>
    %231 = math.exp %230 : vector<8x32xf32>
    %cst_118 = arith.constant 1.000000e+00 : f32
    %232 = vector.broadcast %cst_118 : f32 to vector<8x32xf32>
    %233 = arith.addf %232, %231 : vector<8x32xf32>
    %234 = arith.divf %232, %233 : vector<8x32xf32>
    %c1_119 = arith.constant 1 : index
    %235 = arith.index_cast %224 : i32 to index
    %c0_120 = arith.constant 0 : index
    %236 = vector.load %arg16[%c1_119, %235, %c0_120] : memref<4x64x32xf32, #tpu.memory_space<vmem>>, vector<1x8x32xf32>
    %237 = vector.shape_cast %236 : vector<1x8x32xf32> to vector<8x32xf32>
    %cst_121 = arith.constant dense<0.000000e+00> : vector<8x32xf32>
    %238 = tpu.matmul %222, %44, %cst_121 {dimension_numbers = #tpu.dot_dimension_numbers<[1], [0], [0], [1], [0, 0, 1, 1], [], []>} : vector<8x32xf32>, vector<32x32xf32>, vector<8x32xf32> -> vector<8x32xf32>
    %239 = arith.addf %237, %238 : vector<8x32xf32>
    %240 = arith.negf %239 : vector<8x32xf32>
    %241 = math.exp %240 : vector<8x32xf32>
    %cst_122 = arith.constant 1.000000e+00 : f32
    %242 = vector.broadcast %cst_122 : f32 to vector<8x32xf32>
    %243 = arith.addf %242, %241 : vector<8x32xf32>
    %244 = arith.divf %242, %243 : vector<8x32xf32>
    %c2_123 = arith.constant 2 : index
    %245 = arith.index_cast %224 : i32 to index
    %c0_124 = arith.constant 0 : index
    %246 = vector.load %arg16[%c2_123, %245, %c0_124] : memref<4x64x32xf32, #tpu.memory_space<vmem>>, vector<1x8x32xf32>
    %247 = vector.shape_cast %246 : vector<1x8x32xf32> to vector<8x32xf32>
    %cst_125 = arith.constant dense<0.000000e+00> : vector<8x32xf32>
    %248 = tpu.matmul %222, %46, %cst_125 {dimension_numbers = #tpu.dot_dimension_numbers<[1], [0], [0], [1], [0, 0, 1, 1], [], []>} : vector<8x32xf32>, vector<32x32xf32>, vector<8x32xf32> -> vector<8x32xf32>
    %249 = arith.addf %247, %248 : vector<8x32xf32>
    %250 = math.tanh %249 : vector<8x32xf32>
    %c3_126 = arith.constant 3 : index
    %251 = arith.index_cast %224 : i32 to index
    %c0_127 = arith.constant 0 : index
    %252 = vector.load %arg16[%c3_126, %251, %c0_127] : memref<4x64x32xf32, #tpu.memory_space<vmem>>, vector<1x8x32xf32>
    %253 = vector.shape_cast %252 : vector<1x8x32xf32> to vector<8x32xf32>
    %cst_128 = arith.constant dense<0.000000e+00> : vector<8x32xf32>
    %254 = tpu.matmul %222, %48, %cst_128 {dimension_numbers = #tpu.dot_dimension_numbers<[1], [0], [0], [1], [0, 0, 1, 1], [], []>} : vector<8x32xf32>, vector<32x32xf32>, vector<8x32xf32> -> vector<8x32xf32>
    %255 = arith.addf %253, %254 : vector<8x32xf32>
    %256 = arith.negf %255 : vector<8x32xf32>
    %257 = math.exp %256 : vector<8x32xf32>
    %cst_129 = arith.constant 1.000000e+00 : f32
    %258 = vector.broadcast %cst_129 : f32 to vector<8x32xf32>
    %259 = arith.addf %258, %257 : vector<8x32xf32>
    %260 = arith.divf %258, %259 : vector<8x32xf32>
    %261 = arith.mulf %244, %220 : vector<8x32xf32>
    %262 = arith.mulf %234, %250 : vector<8x32xf32>
    %263 = arith.addf %261, %262 : vector<8x32xf32>
    %264 = math.tanh %263 : vector<8x32xf32>
    %265 = arith.mulf %260, %264 : vector<8x32xf32>
    %c5_i32 = arith.constant 5 : i32
    %c8_i32_130 = arith.constant 8 : i32
    %266 = arith.muli %c5_i32, %c8_i32_130 : i32
    %267 = tpu.assume_multiple %266, 8 : i32
    %c0_131 = arith.constant 0 : index
    %268 = arith.index_cast %267 : i32 to index
    %c0_132 = arith.constant 0 : index
    %269 = vector.load %arg16[%c0_131, %268, %c0_132] : memref<4x64x32xf32, #tpu.memory_space<vmem>>, vector<1x8x32xf32>
    %270 = vector.shape_cast %269 : vector<1x8x32xf32> to vector<8x32xf32>
    %cst_133 = arith.constant dense<0.000000e+00> : vector<8x32xf32>
    %271 = tpu.matmul %265, %42, %cst_133 {dimension_numbers = #tpu.dot_dimension_numbers<[1], [0], [0], [1], [0, 0, 1, 1], [], []>} : vector<8x32xf32>, vector<32x32xf32>, vector<8x32xf32> -> vector<8x32xf32>
    %272 = arith.addf %270, %271 : vector<8x32xf32>
    %273 = arith.negf %272 : vector<8x32xf32>
    %274 = math.exp %273 : vector<8x32xf32>
    %cst_134 = arith.constant 1.000000e+00 : f32
    %275 = vector.broadcast %cst_134 : f32 to vector<8x32xf32>
    %276 = arith.addf %275, %274 : vector<8x32xf32>
    %277 = arith.divf %275, %276 : vector<8x32xf32>
    %c1_135 = arith.constant 1 : index
    %278 = arith.index_cast %267 : i32 to index
    %c0_136 = arith.constant 0 : index
    %279 = vector.load %arg16[%c1_135, %278, %c0_136] : memref<4x64x32xf32, #tpu.memory_space<vmem>>, vector<1x8x32xf32>
    %280 = vector.shape_cast %279 : vector<1x8x32xf32> to vector<8x32xf32>
    %cst_137 = arith.constant dense<0.000000e+00> : vector<8x32xf32>
    %281 = tpu.matmul %265, %44, %cst_137 {dimension_numbers = #tpu.dot_dimension_numbers<[1], [0], [0], [1], [0, 0, 1, 1], [], []>} : vector<8x32xf32>, vector<32x32xf32>, vector<8x32xf32> -> vector<8x32xf32>
    %282 = arith.addf %280, %281 : vector<8x32xf32>
    %283 = arith.negf %282 : vector<8x32xf32>
    %284 = math.exp %283 : vector<8x32xf32>
    %cst_138 = arith.constant 1.000000e+00 : f32
    %285 = vector.broadcast %cst_138 : f32 to vector<8x32xf32>
    %286 = arith.addf %285, %284 : vector<8x32xf32>
    %287 = arith.divf %285, %286 : vector<8x32xf32>
    %c2_139 = arith.constant 2 : index
    %288 = arith.index_cast %267 : i32 to index
    %c0_140 = arith.constant 0 : index
    %289 = vector.load %arg16[%c2_139, %288, %c0_140] : memref<4x64x32xf32, #tpu.memory_space<vmem>>, vector<1x8x32xf32>
    %290 = vector.shape_cast %289 : vector<1x8x32xf32> to vector<8x32xf32>
    %cst_141 = arith.constant dense<0.000000e+00> : vector<8x32xf32>
    %291 = tpu.matmul %265, %46, %cst_141 {dimension_numbers = #tpu.dot_dimension_numbers<[1], [0], [0], [1], [0, 0, 1, 1], [], []>} : vector<8x32xf32>, vector<32x32xf32>, vector<8x32xf32> -> vector<8x32xf32>
    %292 = arith.addf %290, %291 : vector<8x32xf32>
    %293 = math.tanh %292 : vector<8x32xf32>
    %c3_142 = arith.constant 3 : index
    %294 = arith.index_cast %267 : i32 to index
    %c0_143 = arith.constant 0 : index
    %295 = vector.load %arg16[%c3_142, %294, %c0_143] : memref<4x64x32xf32, #tpu.memory_space<vmem>>, vector<1x8x32xf32>
    %296 = vector.shape_cast %295 : vector<1x8x32xf32> to vector<8x32xf32>
    %cst_144 = arith.constant dense<0.000000e+00> : vector<8x32xf32>
    %297 = tpu.matmul %265, %48, %cst_144 {dimension_numbers = #tpu.dot_dimension_numbers<[1], [0], [0], [1], [0, 0, 1, 1], [], []>} : vector<8x32xf32>, vector<32x32xf32>, vector<8x32xf32> -> vector<8x32xf32>
    %298 = arith.addf %296, %297 : vector<8x32xf32>
    %299 = arith.negf %298 : vector<8x32xf32>
    %300 = math.exp %299 : vector<8x32xf32>
    %cst_145 = arith.constant 1.000000e+00 : f32
    %301 = vector.broadcast %cst_145 : f32 to vector<8x32xf32>
    %302 = arith.addf %301, %300 : vector<8x32xf32>
    %303 = arith.divf %301, %302 : vector<8x32xf32>
    %304 = arith.mulf %287, %263 : vector<8x32xf32>
    %305 = arith.mulf %277, %293 : vector<8x32xf32>
    %306 = arith.addf %304, %305 : vector<8x32xf32>
    %307 = math.tanh %306 : vector<8x32xf32>
    %308 = arith.mulf %303, %307 : vector<8x32xf32>
    %c6_i32 = arith.constant 6 : i32
    %c8_i32_146 = arith.constant 8 : i32
    %309 = arith.muli %c6_i32, %c8_i32_146 : i32
    %310 = tpu.assume_multiple %309, 8 : i32
    %c0_147 = arith.constant 0 : index
    %311 = arith.index_cast %310 : i32 to index
    %c0_148 = arith.constant 0 : index
    %312 = vector.load %arg16[%c0_147, %311, %c0_148] : memref<4x64x32xf32, #tpu.memory_space<vmem>>, vector<1x8x32xf32>
    %313 = vector.shape_cast %312 : vector<1x8x32xf32> to vector<8x32xf32>
    %cst_149 = arith.constant dense<0.000000e+00> : vector<8x32xf32>
    %314 = tpu.matmul %308, %42, %cst_149 {dimension_numbers = #tpu.dot_dimension_numbers<[1], [0], [0], [1], [0, 0, 1, 1], [], []>} : vector<8x32xf32>, vector<32x32xf32>, vector<8x32xf32> -> vector<8x32xf32>
    %315 = arith.addf %313, %314 : vector<8x32xf32>
    %316 = arith.negf %315 : vector<8x32xf32>
    %317 = math.exp %316 : vector<8x32xf32>
    %cst_150 = arith.constant 1.000000e+00 : f32
    %318 = vector.broadcast %cst_150 : f32 to vector<8x32xf32>
    %319 = arith.addf %318, %317 : vector<8x32xf32>
    %320 = arith.divf %318, %319 : vector<8x32xf32>
    %c1_151 = arith.constant 1 : index
    %321 = arith.index_cast %310 : i32 to index
    %c0_152 = arith.constant 0 : index
    %322 = vector.load %arg16[%c1_151, %321, %c0_152] : memref<4x64x32xf32, #tpu.memory_space<vmem>>, vector<1x8x32xf32>
    %323 = vector.shape_cast %322 : vector<1x8x32xf32> to vector<8x32xf32>
    %cst_153 = arith.constant dense<0.000000e+00> : vector<8x32xf32>
    %324 = tpu.matmul %308, %44, %cst_153 {dimension_numbers = #tpu.dot_dimension_numbers<[1], [0], [0], [1], [0, 0, 1, 1], [], []>} : vector<8x32xf32>, vector<32x32xf32>, vector<8x32xf32> -> vector<8x32xf32>
    %325 = arith.addf %323, %324 : vector<8x32xf32>
    %326 = arith.negf %325 : vector<8x32xf32>
    %327 = math.exp %326 : vector<8x32xf32>
    %cst_154 = arith.constant 1.000000e+00 : f32
    %328 = vector.broadcast %cst_154 : f32 to vector<8x32xf32>
    %329 = arith.addf %328, %327 : vector<8x32xf32>
    %330 = arith.divf %328, %329 : vector<8x32xf32>
    %c2_155 = arith.constant 2 : index
    %331 = arith.index_cast %310 : i32 to index
    %c0_156 = arith.constant 0 : index
    %332 = vector.load %arg16[%c2_155, %331, %c0_156] : memref<4x64x32xf32, #tpu.memory_space<vmem>>, vector<1x8x32xf32>
    %333 = vector.shape_cast %332 : vector<1x8x32xf32> to vector<8x32xf32>
    %cst_157 = arith.constant dense<0.000000e+00> : vector<8x32xf32>
    %334 = tpu.matmul %308, %46, %cst_157 {dimension_numbers = #tpu.dot_dimension_numbers<[1], [0], [0], [1], [0, 0, 1, 1], [], []>} : vector<8x32xf32>, vector<32x32xf32>, vector<8x32xf32> -> vector<8x32xf32>
    %335 = arith.addf %333, %334 : vector<8x32xf32>
    %336 = math.tanh %335 : vector<8x32xf32>
    %c3_158 = arith.constant 3 : index
    %337 = arith.index_cast %310 : i32 to index
    %c0_159 = arith.constant 0 : index
    %338 = vector.load %arg16[%c3_158, %337, %c0_159] : memref<4x64x32xf32, #tpu.memory_space<vmem>>, vector<1x8x32xf32>
    %339 = vector.shape_cast %338 : vector<1x8x32xf32> to vector<8x32xf32>
    %cst_160 = arith.constant dense<0.000000e+00> : vector<8x32xf32>
    %340 = tpu.matmul %308, %48, %cst_160 {dimension_numbers = #tpu.dot_dimension_numbers<[1], [0], [0], [1], [0, 0, 1, 1], [], []>} : vector<8x32xf32>, vector<32x32xf32>, vector<8x32xf32> -> vector<8x32xf32>
    %341 = arith.addf %339, %340 : vector<8x32xf32>
    %342 = arith.negf %341 : vector<8x32xf32>
    %343 = math.exp %342 : vector<8x32xf32>
    %cst_161 = arith.constant 1.000000e+00 : f32
    %344 = vector.broadcast %cst_161 : f32 to vector<8x32xf32>
    %345 = arith.addf %344, %343 : vector<8x32xf32>
    %346 = arith.divf %344, %345 : vector<8x32xf32>
    %347 = arith.mulf %330, %306 : vector<8x32xf32>
    %348 = arith.mulf %320, %336 : vector<8x32xf32>
    %349 = arith.addf %347, %348 : vector<8x32xf32>
    %350 = math.tanh %349 : vector<8x32xf32>
    %351 = arith.mulf %346, %350 : vector<8x32xf32>
    %c7_i32 = arith.constant 7 : i32
    %c8_i32_162 = arith.constant 8 : i32
    %352 = arith.muli %c7_i32, %c8_i32_162 : i32
    %353 = tpu.assume_multiple %352, 8 : i32
    %c0_163 = arith.constant 0 : index
    %354 = arith.index_cast %353 : i32 to index
    %c0_164 = arith.constant 0 : index
    %355 = vector.load %arg16[%c0_163, %354, %c0_164] : memref<4x64x32xf32, #tpu.memory_space<vmem>>, vector<1x8x32xf32>
    %356 = vector.shape_cast %355 : vector<1x8x32xf32> to vector<8x32xf32>
    %cst_165 = arith.constant dense<0.000000e+00> : vector<8x32xf32>
    %357 = tpu.matmul %351, %42, %cst_165 {dimension_numbers = #tpu.dot_dimension_numbers<[1], [0], [0], [1], [0, 0, 1, 1], [], []>} : vector<8x32xf32>, vector<32x32xf32>, vector<8x32xf32> -> vector<8x32xf32>
    %358 = arith.addf %356, %357 : vector<8x32xf32>
    %359 = arith.negf %358 : vector<8x32xf32>
    %360 = math.exp %359 : vector<8x32xf32>
    %cst_166 = arith.constant 1.000000e+00 : f32
    %361 = vector.broadcast %cst_166 : f32 to vector<8x32xf32>
    %362 = arith.addf %361, %360 : vector<8x32xf32>
    %363 = arith.divf %361, %362 : vector<8x32xf32>
    %c1_167 = arith.constant 1 : index
    %364 = arith.index_cast %353 : i32 to index
    %c0_168 = arith.constant 0 : index
    %365 = vector.load %arg16[%c1_167, %364, %c0_168] : memref<4x64x32xf32, #tpu.memory_space<vmem>>, vector<1x8x32xf32>
    %366 = vector.shape_cast %365 : vector<1x8x32xf32> to vector<8x32xf32>
    %cst_169 = arith.constant dense<0.000000e+00> : vector<8x32xf32>
    %367 = tpu.matmul %351, %44, %cst_169 {dimension_numbers = #tpu.dot_dimension_numbers<[1], [0], [0], [1], [0, 0, 1, 1], [], []>} : vector<8x32xf32>, vector<32x32xf32>, vector<8x32xf32> -> vector<8x32xf32>
    %368 = arith.addf %366, %367 : vector<8x32xf32>
    %369 = arith.negf %368 : vector<8x32xf32>
    %370 = math.exp %369 : vector<8x32xf32>
    %cst_170 = arith.constant 1.000000e+00 : f32
    %371 = vector.broadcast %cst_170 : f32 to vector<8x32xf32>
    %372 = arith.addf %371, %370 : vector<8x32xf32>
    %373 = arith.divf %371, %372 : vector<8x32xf32>
    %c2_171 = arith.constant 2 : index
    %374 = arith.index_cast %353 : i32 to index
    %c0_172 = arith.constant 0 : index
    %375 = vector.load %arg16[%c2_171, %374, %c0_172] : memref<4x64x32xf32, #tpu.memory_space<vmem>>, vector<1x8x32xf32>
    %376 = vector.shape_cast %375 : vector<1x8x32xf32> to vector<8x32xf32>
    %cst_173 = arith.constant dense<0.000000e+00> : vector<8x32xf32>
    %377 = tpu.matmul %351, %46, %cst_173 {dimension_numbers = #tpu.dot_dimension_numbers<[1], [0], [0], [1], [0, 0, 1, 1], [], []>} : vector<8x32xf32>, vector<32x32xf32>, vector<8x32xf32> -> vector<8x32xf32>
    %378 = arith.addf %376, %377 : vector<8x32xf32>
    %379 = math.tanh %378 : vector<8x32xf32>
    %c3_174 = arith.constant 3 : index
    %380 = arith.index_cast %353 : i32 to index
    %c0_175 = arith.constant 0 : index
    %381 = vector.load %arg16[%c3_174, %380, %c0_175] : memref<4x64x32xf32, #tpu.memory_space<vmem>>, vector<1x8x32xf32>
    %382 = vector.shape_cast %381 : vector<1x8x32xf32> to vector<8x32xf32>
    %cst_176 = arith.constant dense<0.000000e+00> : vector<8x32xf32>
    %383 = tpu.matmul %351, %48, %cst_176 {dimension_numbers = #tpu.dot_dimension_numbers<[1], [0], [0], [1], [0, 0, 1, 1], [], []>} : vector<8x32xf32>, vector<32x32xf32>, vector<8x32xf32> -> vector<8x32xf32>
    %384 = arith.addf %382, %383 : vector<8x32xf32>
    %385 = arith.negf %384 : vector<8x32xf32>
    %386 = math.exp %385 : vector<8x32xf32>
    %cst_177 = arith.constant 1.000000e+00 : f32
    %387 = vector.broadcast %cst_177 : f32 to vector<8x32xf32>
    %388 = arith.addf %387, %386 : vector<8x32xf32>
    %389 = arith.divf %387, %388 : vector<8x32xf32>
    %390 = arith.mulf %373, %349 : vector<8x32xf32>
    %391 = arith.mulf %363, %379 : vector<8x32xf32>
    %392 = arith.addf %390, %391 : vector<8x32xf32>
    %393 = math.tanh %392 : vector<8x32xf32>
    %394 = arith.mulf %389, %393 : vector<8x32xf32>
    %c8_i32_178 = arith.constant 8 : i32
    %cst_179 = arith.constant 0.000000e+00 : f32
    %395 = vector.broadcast %cst_179 : f32 to vector<8x32xf32>
    %396 = arith.maximumf %394, %395 : vector<8x32xf32>
    %c0_180 = arith.constant 0 : index
    %c0_181 = arith.constant 0 : index
    %397 = vector.load %arg4[%c0_180, %c0_181] : memref<32x16xf32, #tpu.memory_space<vmem>>, vector<32x16xf32>
    %cst_182 = arith.constant dense<0.000000e+00> : vector<8x16xf32>
    %398 = tpu.matmul %396, %397, %cst_182 {dimension_numbers = #tpu.dot_dimension_numbers<[1], [0], [0], [1], [0, 0, 1, 1], [], []>} : vector<8x32xf32>, vector<32x16xf32>, vector<8x16xf32> -> vector<8x16xf32>
    %c0_183 = arith.constant 0 : index
    %c0_184 = arith.constant 0 : index
    %399 = vector.load %arg5[%c0_183, %c0_184] : memref<1x16xf32, #tpu.memory_space<vmem>>, vector<1x16xf32>
    %400 = vector.broadcast %399 : vector<1x16xf32> to vector<8x16xf32>
    %401 = arith.addf %398, %400 : vector<8x16xf32>
    %c0_185 = arith.constant 0 : index
    %c0_186 = arith.constant 0 : index
    %402 = vector.load %arg6[%c0_185, %c0_186] : memref<32x16xf32, #tpu.memory_space<vmem>>, vector<32x16xf32>
    %cst_187 = arith.constant dense<0.000000e+00> : vector<8x16xf32>
    %403 = tpu.matmul %396, %402, %cst_187 {dimension_numbers = #tpu.dot_dimension_numbers<[1], [0], [0], [1], [0, 0, 1, 1], [], []>} : vector<8x32xf32>, vector<32x16xf32>, vector<8x16xf32> -> vector<8x16xf32>
    %c0_188 = arith.constant 0 : index
    %c0_189 = arith.constant 0 : index
    %404 = vector.load %arg7[%c0_188, %c0_189] : memref<1x16xf32, #tpu.memory_space<vmem>>, vector<1x16xf32>
    %405 = vector.broadcast %404 : vector<1x16xf32> to vector<8x16xf32>
    %406 = arith.addf %403, %405 : vector<8x16xf32>
    %c0_190 = arith.constant 0 : index
    %c0_191 = arith.constant 0 : index
    %407 = vector.load %arg12[%c0_190, %c0_191] : memref<8x16xf32, #tpu.memory_space<vmem>>, vector<8x16xf32>
    %cst_192 = arith.constant 5.000000e-01 : f32
    %408 = vector.broadcast %cst_192 : f32 to vector<8x16xf32>
    %409 = arith.mulf %406, %408 : vector<8x16xf32>
    %410 = math.exp %409 : vector<8x16xf32>
    %411 = arith.mulf %407, %410 : vector<8x16xf32>
    %412 = arith.addf %401, %411 : vector<8x16xf32>
    %c0_193 = arith.constant 0 : index
    %c0_194 = arith.constant 0 : index
    %413 = vector.load %arg8[%c0_193, %c0_194] : memref<16x32xf32, #tpu.memory_space<vmem>>, vector<16x32xf32>
    %cst_195 = arith.constant dense<0.000000e+00> : vector<8x32xf32>
    %414 = tpu.matmul %412, %413, %cst_195 {dimension_numbers = #tpu.dot_dimension_numbers<[1], [0], [0], [1], [0, 0, 1, 1], [], []>} : vector<8x16xf32>, vector<16x32xf32>, vector<8x32xf32> -> vector<8x32xf32>
    %c0_196 = arith.constant 0 : index
    %c0_197 = arith.constant 0 : index
    %415 = vector.load %arg9[%c0_196, %c0_197] : memref<1x32xf32, #tpu.memory_space<vmem>>, vector<1x32xf32>
    %416 = vector.broadcast %415 : vector<1x32xf32> to vector<8x32xf32>
    %417 = arith.addf %414, %416 : vector<8x32xf32>
    %cst_198 = arith.constant 0.000000e+00 : f32
    %418 = vector.broadcast %cst_198 : f32 to vector<8x32xf32>
    %419 = arith.maximumf %417, %418 : vector<8x32xf32>
    %c0_199 = arith.constant 0 : index
    %c0_200 = arith.constant 0 : index
    %420 = vector.load %arg10[%c0_199, %c0_200] : memref<32x4xf32, #tpu.memory_space<vmem>>, vector<32x4xf32>
    %cst_201 = arith.constant dense<0.000000e+00> : vector<8x4xf32>
    %421 = tpu.matmul %419, %420, %cst_201 {dimension_numbers = #tpu.dot_dimension_numbers<[1], [0], [0], [1], [0, 0, 1, 1], [], []>} : vector<8x32xf32>, vector<32x4xf32>, vector<8x4xf32> -> vector<8x4xf32>
    %c0_202 = arith.constant 0 : index
    %c0_203 = arith.constant 0 : index
    %422 = vector.load %arg11[%c0_202, %c0_203] : memref<1x4xf32, #tpu.memory_space<vmem>>, vector<1x4xf32>
    %423 = vector.broadcast %422 : vector<1x4xf32> to vector<8x4xf32>
    %424 = arith.addf %421, %423 : vector<8x4xf32>
    %425 = arith.negf %424 : vector<8x4xf32>
    %426 = math.exp %425 : vector<8x4xf32>
    %cst_204 = arith.constant 1.000000e+00 : f32
    %427 = vector.broadcast %cst_204 : f32 to vector<8x4xf32>
    %428 = arith.addf %427, %426 : vector<8x4xf32>
    %429 = arith.divf %427, %428 : vector<8x4xf32>
    %c0_205 = arith.constant 0 : index
    %c0_206 = arith.constant 0 : index
    %430 = vector.load %arg13[%c0_205, %c0_206] : memref<8x4xf32, #tpu.memory_space<vmem>>, vector<8x4xf32>
    tpu.vector_store %arg13[%c0_205, %c0_206], %429 {strides = array<i32>} : memref<8x4xf32, #tpu.memory_space<vmem>>, vector<8x4xf32>,
    %c0_207 = arith.constant 0 : index
    %c0_208 = arith.constant 0 : index
    %431 = vector.load %arg14[%c0_207, %c0_208] : memref<8x16xf32, #tpu.memory_space<vmem>>, vector<8x16xf32>
    tpu.vector_store %arg14[%c0_207, %c0_208], %401 {strides = array<i32>} : memref<8x16xf32, #tpu.memory_space<vmem>>, vector<8x16xf32>,
    %c0_209 = arith.constant 0 : index
    %c0_210 = arith.constant 0 : index
    %432 = vector.load %arg15[%c0_209, %c0_210] : memref<8x16xf32, #tpu.memory_space<vmem>>, vector<8x16xf32>
    tpu.vector_store %arg15[%c0_209, %c0_210], %406 {strides = array<i32>} : memref<8x16xf32, #tpu.memory_space<vmem>>, vector<8x16xf32>,
    return
  }
}

</mosaic_0001>

<llo_original>
// kernel: fbvae_forward.1
$region0: #{fbvae_forward.1}
  #allocation0 [shape = 'u32[]', space=smem, size = 0x4, offset = 0x4, fixed_abs, tag = 'smem constant byte address 0x4 - core index']
  #allocation1 [shape = 'u32[72,128]{1,0:T(1,128)}', space=vmem, size = 0x9000, scoped, tag = 'internal scratch']
  #allocation2 [shape = 'f32[4,64,32]{2,1,0:T(8,128)}', space=vmem, size = 0x20000, scoped, tag = 'scratch operand']
  %s0 = inlined_call_operand.vmem [shape: f32[64,4], index: 0, kind: input, shape index: {}]
  %s1 = inlined_call_operand.vmem [shape: f32[4,4,32], index: 1, kind: input, shape index: {}]
  %s2 = inlined_call_operand.vmem [shape: f32[4,32,32], index: 2, kind: input, shape index: {}]
  %s3 = inlined_call_operand.vmem [shape: f32[4,1,32], index: 3, kind: input, shape index: {}]
  %s4 = inlined_call_operand.vmem [shape: f32[32,16], index: 4, kind: input, shape index: {}]
  %s5 = inlined_call_operand.vmem [shape: f32[1,16], index: 5, kind: input, shape index: {}]
  %s6 = inlined_call_operand.vmem [shape: f32[32,16], index: 6, kind: input, shape index: {}]
  %s7 = inlined_call_operand.vmem [shape: f32[1,16], index: 7, kind: input, shape index: {}]
  %s8 = inlined_call_operand.vmem [shape: f32[16,32], index: 8, kind: input, shape index: {}]
  %s9 = inlined_call_operand.vmem [shape: f32[1,32], index: 9, kind: input, shape index: {}]
  %s10 = inlined_call_operand.vmem [shape: f32[32,4], index: 10, kind: input, shape index: {}]
  %s11 = inlined_call_operand.vmem [shape: f32[1,4], index: 11, kind: input, shape index: {}]
  %s12 = inlined_call_operand.vmem [shape: f32[8,16], index: 12, kind: input, shape index: {}]
  %s13 = inlined_call_operand.vmem [shape: f32[8,4], index: 13, kind: output, shape index: {0}]
  %s14 = inlined_call_operand.hbm [shape: f32[8,16], index: 14, kind: output, shape index: {1}]
  %s15 = inlined_call_operand.hbm [shape: f32[8,16], index: 15, kind: output, shape index: {2}]
  %16 = xla_tuple %s13, %s14, %s15
  %s17 = sld [smem:[#allocation0]]
  $region78: #{fbvae_forward.1} parent=0
    _
  %s19 = ssub.s32 1, %s17
  %s20 = scalar_select 0, %s19, %s17
  $region1: #{fbvae_forward.1} parent=0
    #allocation3 [shape = 'u8[4096]{0}', space=vmem, size = 0x1000, scoped, tag = 'output window, operand 1, single buffered']
    #allocation4 [shape = 's32[1]{0}', space=sflag, size = 0x4, scoped, tag = 'scoped memory for fbvae_forward.1']
    #allocation5 [shape = 'u8[4096]{0}', space=vmem, size = 0x1000, scoped, tag = 'output window, operand 2, single buffered']
    #allocation6 [shape = 's32[1]{0}', space=sflag, size = 0x4, scoped, tag = 'scoped memory for fbvae_forward.1']
    %21 = vsyncpa [#allocation4], 0
    %22 = vsyncpa [#allocation6], 0
    // Predicated region
    $region2: #{fbvae_forward.1} parent=1 // pred_check
      _
    $region3: #{fbvae_forward.1} parent=1 // pred_check_branch
      %24 = sbr.rel (0) target = $region5
    $region4: #{fbvae_forward.1} parent=1 // pred_region
      _
    $region5: #{fbvae_forward.1} parent=1 // pred_fallthru
      _
    // Predicated region
    $region6: #{fbvae_forward.1} parent=1 // pred_check
      _
    $region7: #{fbvae_forward.1} parent=1 // pred_check_branch
      %26 = sbr.rel (0) target = $region9
    $region8: #{fbvae_forward.1} parent=1 // pred_region
      _
    $region9: #{fbvae_forward.1} parent=1 // pred_fallthru
      _
    // Predicated region
    $region10: #{fbvae_forward.1} parent=1 // pred_check
      _
    $region11: #{fbvae_forward.1} parent=1 // pred_check_branch
      %28 = sbr.rel (0) target = $region13
    $region12: #{fbvae_forward.1} parent=1 // pred_region
      _
    $region13: #{fbvae_forward.1} parent=1 // pred_fallthru
      _
    // Predicated region
    $region14: #{fbvae_forward.1} parent=1 // pred_check
      _
    $region15: #{fbvae_forward.1} parent=1 // pred_check_branch
      %30 = sbr.rel (0) target = $region17
    $region16: #{fbvae_forward.1} parent=1 // pred_region
      _
    $region17: #{fbvae_forward.1} parent=1 // pred_fallthru
      _
    // Predicated region
    $region18: #{fbvae_forward.1} parent=1 // pred_check
      _
    $region19: #{fbvae_forward.1} parent=1 // pred_check_branch
      %32 = sbr.rel (0) target = $region21
    $region20: #{fbvae_forward.1} parent=1 // pred_region
      _
    $region21: #{fbvae_forward.1} parent=1 // pred_fallthru
      _
    // Predicated region
    $region22: #{fbvae_forward.1} parent=1 // pred_check
      _
    $region23: #{fbvae_forward.1} parent=1 // pred_check_branch
      %34 = sbr.rel (0) target = $region25
    $region24: #{fbvae_forward.1} parent=1 // pred_region
      _
    $region25: #{fbvae_forward.1} parent=1 // pred_fallthru
      _
    // Predicated region
    $region26: #{fbvae_forward.1} parent=1 // pred_check
      _
    $region27: #{fbvae_forward.1} parent=1 // pred_check_branch
      %36 = sbr.rel (0) target = $region29
    $region28: #{fbvae_forward.1} parent=1 // pred_region
      _
    $region29: #{fbvae_forward.1} parent=1 // pred_fallthru
      _
    // Predicated region
    $region30: #{fbvae_forward.1} parent=1 // pred_check
      _
    $region31: #{fbvae_forward.1} parent=1 // pred_check_branch
      %38 = sbr.rel (0) target = $region33
    $region32: #{fbvae_forward.1} parent=1 // pred_region
      _
    $region33: #{fbvae_forward.1} parent=1 // pred_fallthru
      _
    // Predicated region
    $region34: #{fbvae_forward.1} parent=1 // pred_check
      _
    $region35: #{fbvae_forward.1} parent=1 // pred_check_branch
      %40 = sbr.rel (0) target = $region37
    $region36: #{fbvae_forward.1} parent=1 // pred_region
      _
    $region37: #{fbvae_forward.1} parent=1 // pred_fallthru
      _
    // Predicated region
    $region38: #{fbvae_forward.1} parent=1 // pred_check
      _
    $region39: #{fbvae_forward.1} parent=1 // pred_check_branch
      %42 = sbr.rel (0) target = $region41
    $region40: #{fbvae_forward.1} parent=1 // pred_region
      _
    $region41: #{fbvae_forward.1} parent=1 // pred_fallthru
      _
    // Predicated region
    $region42: #{fbvae_forward.1} parent=1 // pred_check
      _
    $region43: #{fbvae_forward.1} parent=1 // pred_check_branch
      %44 = sbr.rel (0) target = $region45
    $region44: #{fbvae_forward.1} parent=1 // pred_region
      _
    $region45: #{fbvae_forward.1} parent=1 // pred_fallthru
      _
    // Predicated region
    $region46: #{fbvae_forward.1} parent=1 // pred_check
      _
    $region47: #{fbvae_forward.1} parent=1 // pred_check_branch
      %46 = sbr.rel (0) target = $region49
    $region48: #{fbvae_forward.1} parent=1 // pred_region
      _
    $region49: #{fbvae_forward.1} parent=1 // pred_fallthru
      _
    // Predicated region
    $region50: #{fbvae_forward.1} parent=1 // pred_check
      _
    $region51: #{fbvae_forward.1} parent=1 // pred_check_branch
      %48 = sbr.rel (0) target = $region53
    $region52: #{fbvae_forward.1} parent=1 // pred_region
      _
    $region53: #{fbvae_forward.1} parent=1 // pred_fallthru
      _
    %v49 = vld [vmem:[%s0] sm:$0xff]
    %v50 = vld [vmem:[%s0 + $0x8] sm:$0xff]
    %v51 = vld [vmem:[%s0 + $0x10] sm:$0xff]
    %v52 = vld [vmem:[%s0 + $0x18] sm:$0xff]
    %v53 = vld [vmem:[%s0 + $0x20] sm:$0xff]
    %v54 = vld [vmem:[%s0 + $0x28] sm:$0xff]
    %v55 = vld [vmem:[%s0 + $0x30] sm:$0xff]
    %v56 = vld [vmem:[%s0 + $0x38] sm:$0xff]
    %v57 = vld [vmem:[%s1] sm:$0xf]
    %v58 = vld [vmem:[%s3] sm:$0x1]
    %v60 = vperm.slane %v58, 0
    %vm62 = vcmask 31744
    %v64 = vsel %vm62, %v49, 0
    %v67 = vsel %vm62, %v50, 0
    %v70 = vsel %vm62, %v51, 0
    %v73 = vsel %vm62, %v52, 0
    %v76 = vsel %vm62, %v53, 0
    %v79 = vsel %vm62, %v54, 0
    %v82 = vsel %vm62, %v55, 0
    %v85 = vsel %vm62, %v56, 0
    %vm87 = vcmask 1043456
    %v89 = vsel %vm87, %v57, 0
    %91 = vmatpush.msra.mxu0 0.0
    %92 = vmatpush.msra.mxu0 0.0
    %93 = vmatpush.msra.mxu0 0.0
    %94 = vmatpush.msra.mxu0 0.0
    %95 = vmatpush.msra.mxu0 0.0
    %96 = vmatpush.msra.mxu0 0.0
    %97 = vmatpush.msra.mxu0 0.0
    %98 = vmatpush.msra.mxu0 0.0
    %99 = vmatpush.msra.mxu0 0.0
    %100 = vmatpush.msra.mxu0 0.0
    %101 = vmatpush.msra.mxu0 0.0
    %102 = vmatpush.msra.mxu0 0.0
    %103 = vmatpush.msra.mxu0 0.0
    %104 = vmatpush.msra.mxu0 0.0
    %105 = vmatpush.msra.mxu0 0.0
    %106 = vmatpush.msra.mxu0 %v89
    %107 = vmatmul.f32.gmra.mxu0 %v64
    %v108 = vpop.f32.mrf.mxu0
    %v109 = vadd.f32 %v60, %v108
    %110 = vmatmul.f32.gmra.mxu0 %v67
    %v111 = vpop.f32.mrf.mxu0
    %v112 = vadd.f32 %v60, %v111
    %113 = vmatmul.f32.gmra.mxu0 %v70
    %v114 = vpop.f32.mrf.mxu0
    %v115 = vadd.f32 %v60, %v114
    %116 = vmatmul.f32.gmra.mxu0 %v73
    %v117 = vpop.f32.mrf.mxu0
    %v118 = vadd.f32 %v60, %v117
    %119 = vmatmul.f32.gmra.mxu0 %v76
    %v120 = vpop.f32.mrf.mxu0
    %v121 = vadd.f32 %v60, %v120
    %122 = vmatmul.f32.gmra.mxu0 %v79
    %v123 = vpop.f32.mrf.mxu0
    %v124 = vadd.f32 %v60, %v123
    %125 = vmatmul.f32.gmra.mxu0 %v82
    %v126 = vpop.f32.mrf.mxu0
    %v127 = vadd.f32 %v60, %v126
    %128 = vmatmul.f32.gmra.mxu0 %v85
    %v129 = vpop.f32.mrf.mxu0
    %v130 = vadd.f32 %v60, %v129
    %131 = vdwg.mxu0
    %vm132 = vcmask 261120
    %133 = vst.msk [vmem:[#allocation2] sm:$0xff] %vm132, %v109
    %134 = vst.msk [vmem:[#allocation2 + $0x8] sm:$0xff] %vm132, %v112
    %135 = vst.msk [vmem:[#allocation2 + $0x10] sm:$0xff] %vm132, %v115
    %136 = vst.msk [vmem:[#allocation2 + $0x18] sm:$0xff] %vm132, %v118
    %137 = vst.msk [vmem:[#allocation2 + $0x20] sm:$0xff] %vm132, %v121
    %138 = vst.msk [vmem:[#allocation2 + $0x28] sm:$0xff] %vm132, %v124
    %139 = vst.msk [vmem:[#allocation2 + $0x30] sm:$0xff] %vm132, %v127
    %140 = vst.msk [vmem:[#allocation2 + $0x38] sm:$0xff] %vm132, %v130
    %s141 = scalar_lea.vmem %s1, 4
    %v142 = vld [vmem:[%s141] sm:$0xf]
    %s143 = scalar_lea.vmem %s3, 1
    %v144 = vld [vmem:[%s143] sm:$0x1]
    %v146 = vperm.slane %v144, 0
    %v149 = vsel %vm87, %v142, 0
    %151 = vmatpush.msra.mxu0 0.0
    %152 = vmatpush.msra.mxu0 0.0
    %153 = vmatpush.msra.mxu0 0.0
    %154 = vmatpush.msra.mxu0 0.0
    %155 = vmatpush.msra.mxu0 0.0
    %156 = vmatpush.msra.mxu0 0.0
    %157 = vmatpush.msra.mxu0 0.0
    %158 = vmatpush.msra.mxu0 0.0
    %159 = vmatpush.msra.mxu0 0.0
    %160 = vmatpush.msra.mxu0 0.0
    %161 = vmatpush.msra.mxu0 0.0
    %162 = vmatpush.msra.mxu0 0.0
    %163 = vmatpush.msra.mxu0 0.0
    %164 = vmatpush.msra.mxu0 0.0
    %165 = vmatpush.msra.mxu0 0.0
    %166 = vmatpush.msra.mxu0 %v149
    %167 = vmatmul.f32.gmra.mxu0 %v64
    %v168 = vpop.f32.mrf.mxu0
    %v169 = vadd.f32 %v146, %v168
    %170 = vmatmul.f32.gmra.mxu0 %v67
    %v171 = vpop.f32.mrf.mxu0
    %v172 = vadd.f32 %v146, %v171
    %173 = vmatmul.f32.gmra.mxu0 %v70
    %v174 = vpop.f32.mrf.mxu0
    %v175 = vadd.f32 %v146, %v174
    %176 = vmatmul.f32.gmra.mxu0 %v73
    %v177 = vpop.f32.mrf.mxu0
    %v178 = vadd.f32 %v146, %v177
    %179 = vmatmul.f32.gmra.mxu0 %v76
    %v180 = vpop.f32.mrf.mxu0
    %v181 = vadd.f32 %v146, %v180
    %182 = vmatmul.f32.gmra.mxu0 %v79
    %v183 = vpop.f32.mrf.mxu0
    %v184 = vadd.f32 %v146, %v183
    %185 = vmatmul.f32.gmra.mxu0 %v82
    %v186 = vpop.f32.mrf.mxu0
    %v187 = vadd.f32 %v146, %v186
    %188 = vmatmul.f32.gmra.mxu0 %v85
    %v189 = vpop.f32.mrf.mxu0
    %v190 = vadd.f32 %v146, %v189
    %191 = vdwg.mxu0
    %s192 = scalar_lea.vmem [#allocation2], 64
    %193 = vst.msk [vmem:[%s192] sm:$0xff] %vm132, %v169
    %194 = vst.msk [vmem:[%s192 + $0x8] sm:$0xff] %vm132, %v172
    %195 = vst.msk [vmem:[%s192 + $0x10] sm:$0xff] %vm132, %v175
    %196 = vst.msk [vmem:[%s192 + $0x18] sm:$0xff] %vm132, %v178
    %197 = vst.msk [vmem:[%s192 + $0x20] sm:$0xff] %vm132, %v181
    %198 = vst.msk [vmem:[%s192 + $0x28] sm:$0xff] %vm132, %v184
    %199 = vst.msk [vmem:[%s192 + $0x30] sm:$0xff] %vm132, %v187
    %200 = vst.msk [vmem:[%s192 + $0x38] sm:$0xff] %vm132, %v190
    %s201 = scalar_lea.vmem %s1, 8
    %v202 = vld [vmem:[%s201] sm:$0xf]
    %s203 = scalar_lea.vmem %s3, 2
    %v204 = vld [vmem:[%s203] sm:$0x1]
    %v206 = vperm.slane %v204, 0
    %v209 = vsel %vm87, %v202, 0
    %211 = vmatpush.msra.mxu0 0.0
    %212 = vmatpush.msra.mxu0 0.0
    %213 = vmatpush.msra.mxu0 0.0
    %214 = vmatpush.msra.mxu0 0.0
    %215 = vmatpush.msra.mxu0 0.0
    %216 = vmatpush.msra.mxu0 0.0
    %217 = vmatpush.msra.mxu0 0.0
    %218 = vmatpush.msra.mxu0 0.0
    %219 = vmatpush.msra.mxu0 0.0
    %220 = vmatpush.msra.mxu0 0.0
    %221 = vmatpush.msra.mxu0 0.0
    %222 = vmatpush.msra.mxu0 0.0
    %223 = vmatpush.msra.mxu0 0.0
    %224 = vmatpush.msra.mxu0 0.0
    %225 = vmatpush.msra.mxu0 0.0
    %226 = vmatpush.msra.mxu0 %v209
    %227 = vmatmul.f32.gmra.mxu0 %v64
    %v228 = vpop.f32.mrf.mxu0
    %v229 = vadd.f32 %v206, %v228
    %230 = vmatmul.f32.gmra.mxu0 %v67
    %v231 = vpop.f32.mrf.mxu0
    %v232 = vadd.f32 %v206, %v231
    %233 = vmatmul.f32.gmra.mxu0 %v70
    %v234 = vpop.f32.mrf.mxu0
    %v235 = vadd.f32 %v206, %v234
    %236 = vmatmul.f32.gmra.mxu0 %v73
    %v237 = vpop.f32.mrf.mxu0
    %v238 = vadd.f32 %v206, %v237
    %239 = vmatmul.f32.gmra.mxu0 %v76
    %v240 = vpop.f32.mrf.mxu0
    %v241 = vadd.f32 %v206, %v240
    %242 = vmatmul.f32.gmra.mxu0 %v79
    %v243 = vpop.f32.mrf.mxu0
    %v244 = vadd.f32 %v206, %v243
    %245 = vmatmul.f32.gmra.mxu0 %v82
    %v246 = vpop.f32.mrf.mxu0
    %v247 = vadd.f32 %v206, %v246
    %248 = vmatmul.f32.gmra.mxu0 %v85
    %v249 = vpop.f32.mrf.mxu0
    %v250 = vadd.f32 %v206, %v249
    %251 = vdwg.mxu0
    %s252 = scalar_lea.vmem [#allocation2], 128
    %253 = vst.msk [vmem:[%s252] sm:$0xff] %vm132, %v229
    %254 = vst.msk [vmem:[%s252 + $0x8] sm:$0xff] %vm132, %v232
    %255 = vst.msk [vmem:[%s252 + $0x10] sm:$0xff] %vm132, %v235
    %256 = vst.msk [vmem:[%s252 + $0x18] sm:$0xff] %vm132, %v238
    %257 = vst.msk [vmem:[%s252 + $0x20] sm:$0xff] %vm132, %v241
    %258 = vst.msk [vmem:[%s252 + $0x28] sm:$0xff] %vm132, %v244
    %259 = vst.msk [vmem:[%s252 + $0x30] sm:$0xff] %vm132, %v247
    %260 = vst.msk [vmem:[%s252 + $0x38] sm:$0xff] %vm132, %v250
    %s261 = scalar_lea.vmem %s1, 12
    %v262 = vld [vmem:[%s261] sm:$0xf]
    %s263 = scalar_lea.vmem %s3, 3
    %v264 = vld [vmem:[%s263] sm:$0x1]
    %v266 = vperm.slane %v264, 0
    %v269 = vsel %vm87, %v262, 0
    %271 = vmatpush.msra.mxu0 0.0
    %272 = vmatpush.msra.mxu0 0.0
    %273 = vmatpush.msra.mxu0 0.0
    %274 = vmatpush.msra.mxu0 0.0
    %275 = vmatpush.msra.mxu0 0.0
    %276 = vmatpush.msra.mxu0 0.0
    %277 = vmatpush.msra.mxu0 0.0
    %278 = vmatpush.msra.mxu0 0.0
    %279 = vmatpush.msra.mxu0 0.0
    %280 = vmatpush.msra.mxu0 0.0
    %281 = vmatpush.msra.mxu0 0.0
    %282 = vmatpush.msra.mxu0 0.0
    %283 = vmatpush.msra.mxu0 0.0
    %284 = vmatpush.msra.mxu0 0.0
    %285 = vmatpush.msra.mxu0 0.0
    %286 = vmatpush.msra.mxu0 %v269
    %287 = vmatmul.f32.gmra.mxu0 %v64
    %v288 = vpop.f32.mrf.mxu0
    %v289 = vadd.f32 %v266, %v288
    %290 = vmatmul.f32.gmra.mxu0 %v67
    %v291 = vpop.f32.mrf.mxu0
    %v292 = vadd.f32 %v266, %v291
    %293 = vmatmul.f32.gmra.mxu0 %v70
    %v294 = vpop.f32.mrf.mxu0
    %v295 = vadd.f32 %v266, %v294
    %296 = vmatmul.f32.gmra.mxu0 %v73
    %v297 = vpop.f32.mrf.mxu0
    %v298 = vadd.f32 %v266, %v297
    %299 = vmatmul.f32.gmra.mxu0 %v76
    %v300 = vpop.f32.mrf.mxu0
    %v301 = vadd.f32 %v266, %v300
    %302 = vmatmul.f32.gmra.mxu0 %v79
    %v303 = vpop.f32.mrf.mxu0
    %v304 = vadd.f32 %v266, %v303
    %305 = vmatmul.f32.gmra.mxu0 %v82
    %v306 = vpop.f32.mrf.mxu0
    %v307 = vadd.f32 %v266, %v306
    %308 = vmatmul.f32.gmra.mxu0 %v85
    %v309 = vpop.f32.mrf.mxu0
    %v310 = vadd.f32 %v266, %v309
    %311 = vdwg.mxu0
    %s312 = scalar_lea.vmem [#allocation2], 192
    %313 = vst.msk [vmem:[%s312] sm:$0xff] %vm132, %v289
    %314 = vst.msk [vmem:[%s312 + $0x8] sm:$0xff] %vm132, %v292
    %315 = vst.msk [vmem:[%s312 + $0x10] sm:$0xff] %vm132, %v295
    %316 = vst.msk [vmem:[%s312 + $0x18] sm:$0xff] %vm132, %v298
    %317 = vst.msk [vmem:[%s312 + $0x20] sm:$0xff] %vm132, %v301
    %318 = vst.msk [vmem:[%s312 + $0x28] sm:$0xff] %vm132, %v304
    %319 = vst.msk [vmem:[%s312 + $0x30] sm:$0xff] %vm132, %v307
    %320 = vst.msk [vmem:[%s312 + $0x38] sm:$0xff] %vm132, %v310
    %v321 = vld [vmem:[%s2] sm:$0xff]
    %v322 = vld [vmem:[%s2 + $0x8] sm:$0xff]
    %v323 = vld [vmem:[%s2 + $0x10] sm:$0xff]
    %v324 = vld [vmem:[%s2 + $0x18] sm:$0xff]
    %s325 = scalar_lea.vmem %s2, 32
    %v326 = vld [vmem:[%s325] sm:$0xff]
    %v327 = vld [vmem:[%s325 + $0x8] sm:$0xff]
    %v328 = vld [vmem:[%s325 + $0x10] sm:$0xff]
    %v329 = vld [vmem:[%s325 + $0x18] sm:$0xff]
    %s330 = scalar_lea.vmem %s2, 64
    %v331 = vld [vmem:[%s330] sm:$0xff]
    %v332 = vld [vmem:[%s330 + $0x8] sm:$0xff]
    %v333 = vld [vmem:[%s330 + $0x10] sm:$0xff]
    %v334 = vld [vmem:[%s330 + $0x18] sm:$0xff]
    %s335 = scalar_lea.vmem %s2, 96
    %v336 = vld [vmem:[%s335] sm:$0xff]
    %v337 = vld [vmem:[%s335 + $0x8] sm:$0xff]
    %v338 = vld [vmem:[%s335 + $0x10] sm:$0xff]
    %v339 = vld [vmem:[%s335 + $0x18] sm:$0xff]
    %v340 = vld [vmem:[#allocation2] sm:$0xff]
    %v342 = vsel %vm132, 0.0, 0
    %344 = vmatpush.msra.mxu0 0.0
    %345 = vmatpush.msra.mxu0 0.0
    %346 = vmatpush.msra.mxu0 0.0
    %347 = vmatpush.msra.mxu0 0.0
    %348 = vmatpush.msra.mxu0 0.0
    %349 = vmatpush.msra.mxu0 0.0
    %350 = vmatpush.msra.mxu0 0.0
    %351 = vmatpush.msra.mxu0 0.0
    %352 = vmatpush.msra.mxu0 0.0
    %353 = vmatpush.msra.mxu0 0.0
    %354 = vmatpush.msra.mxu0 0.0
    %355 = vmatpush.msra.mxu0 0.0
    %356 = vmatpush.msra.mxu0 %v324
    %357 = vmatpush.msra.mxu0 %v323
    %358 = vmatpush.msra.mxu0 %v322
    %359 = vmatpush.msra.mxu0 %v321
    %360 = vmatmul.f32.gmra.mxu0 %v342
    %v361 = vpop.f32.mrf.mxu0
    %v362 = vadd.f32 0.0, %v361
    %363 = vdwg.mxu0
    %v364 = vadd.f32 %v340, %v362
    %v365 = vxor.u32 %v364, 2147483648
    %v366 = vmul.f32 %v365, 1.442695
    %v367 = vpow.pop %v366
    %v368 = vadd.f32 %v367, 1.0
    %v369 = vrcp.pop %v368
    %v370 = vmul.f32 %v368, %v369
    %v371 = vsub.f32 1.0, %v370
    %v372 = vmul.f32 %v369, %v371
    %v373 = vadd.f32 %v369, %v372
    %vm374 = vweird.f32 %v368
    %vm375 = vweird.f32 %v369
    %vm376 = vmor %vm374, %vm375
    %v377 = vsel %vm376, %v369, %v373
    %v378 = vand.u32 2147483647, %v368
    %vm379 = vcmp.eq.f32.partialorder %v378, 8.507059e+37
    %v380 = vand.u32 %v368, 2147483648
    %v381 = vor.u32 1.1754944e-38, %v380
    %v382 = vsel %vm379, %v381, %v377
    %v383 = vmul.f32 1.0, %v382
    %s384 = sadd.s32 0, 64
    %s385 = scalar_lea.vmem [#allocation2], %s384
    %v386 = vld [vmem:[%s385] sm:$0xff]
    %387 = vmatpush.msra.mxu0 0.0
    %388 = vmatpush.msra.mxu0 0.0
    %389 = vmatpush.msra.mxu0 0.0
    %390 = vmatpush.msra.mxu0 0.0
    %391 = vmatpush.msra.mxu0 0.0
    %392 = vmatpush.msra.mxu0 0.0
    %393 = vmatpush.msra.mxu0 0.0
    %394 = vmatpush.msra.mxu0 0.0
    %395 = vmatpush.msra.mxu0 0.0
    %396 = vmatpush.msra.mxu0 0.0
    %397 = vmatpush.msra.mxu0 0.0
    %398 = vmatpush.msra.mxu0 0.0
    %399 = vmatpush.msra.mxu0 %v329
    %400 = vmatpush.msra.mxu0 %v328
    %401 = vmatpush.msra.mxu0 %v327
    %402 = vmatpush.msra.mxu0 %v326
    %403 = vmatmul.f32.gmra.mxu0 %v342
    %v404 = vpop.f32.mrf.mxu0
    %v405 = vadd.f32 0.0, %v404
    %406 = vdwg.mxu0
    %v407 = vadd.f32 %v386, %v405
    %v408 = vxor.u32 %v407, 2147483648
    %v409 = vmul.f32 %v408, 1.442695
    %v410 = vpow.pop %v409
    %v411 = vadd.f32 %v410, 1.0
    %v412 = vrcp.pop %v411
    %v413 = vmul.f32 %v411, %v412
    %v414 = vsub.f32 1.0, %v413
    %v415 = vmul.f32 %v412, %v414
    %v416 = vadd.f32 %v412, %v415
    %vm417 = vweird.f32 %v411
    %vm418 = vweird.f32 %v412
    %vm419 = vmor %vm417, %vm418
    %v420 = vsel %vm419, %v412, %v416
    %v421 = vand.u32 2147483647, %v411
    %vm422 = vcmp.eq.f32.partialorder %v421, 8.507059e+37
    %v423 = vand.u32 %v411, 2147483648
    %v424 = vor.u32 1.1754944e-38, %v423
    %v425 = vsel %vm422, %v424, %v420
    %v426 = vmul.f32 1.0, %v425
    %s427 = sadd.s32 0, 128
    %s428 = scalar_lea.vmem [#allocation2], %s427
    %v429 = vld [vmem:[%s428] sm:$0xff]
    %430 = vmatpush.msra.mxu0 0.0
    %431 = vmatpush.msra.mxu0 0.0
    %432 = vmatpush.msra.mxu0 0.0
    %433 = vmatpush.msra.mxu0 0.0
    %434 = vmatpush.msra.mxu0 0.0
    %435 = vmatpush.msra.mxu0 0.0
    %436 = vmatpush.msra.mxu0 0.0
    %437 = vmatpush.msra.mxu0 0.0
    %438 = vmatpush.msra.mxu0 0.0
    %439 = vmatpush.msra.mxu0 0.0
    %440 = vmatpush.msra.mxu0 0.0
    %441 = vmatpush.msra.mxu0 0.0
    %442 = vmatpush.msra.mxu0 %v334
    %443 = vmatpush.msra.mxu0 %v333
    %444 = vmatpush.msra.mxu0 %v332
    %445 = vmatpush.msra.mxu0 %v331
    %446 = vmatmul.f32.gmra.mxu0 %v342
    %v447 = vpop.f32.mrf.mxu0
    %v448 = vadd.f32 0.0, %v447
    %449 = vdwg.mxu0
    %v450 = vadd.f32 %v429, %v448
    %v451 = vtanh.pop %v450
    %s452 = sadd.s32 0, 192
    %s453 = scalar_lea.vmem [#allocation2], %s452
    %v454 = vld [vmem:[%s453] sm:$0xff]
    %455 = vmatpush.msra.mxu0 0.0
    %456 = vmatpush.msra.mxu0 0.0
    %457 = vmatpush.msra.mxu0 0.0
    %458 = vmatpush.msra.mxu0 0.0
    %459 = vmatpush.msra.mxu0 0.0
    %460 = vmatpush.msra.mxu0 0.0
    %461 = vmatpush.msra.mxu0 0.0
    %462 = vmatpush.msra.mxu0 0.0
    %463 = vmatpush.msra.mxu0 0.0
    %464 = vmatpush.msra.mxu0 0.0
    %465 = vmatpush.msra.mxu0 0.0
    %466 = vmatpush.msra.mxu0 0.0
    %467 = vmatpush.msra.mxu0 %v339
    %468 = vmatpush.msra.mxu0 %v338
    %469 = vmatpush.msra.mxu0 %v337
    %470 = vmatpush.msra.mxu0 %v336
    %471 = vmatmul.f32.gmra.mxu0 %v342
    %v472 = vpop.f32.mrf.mxu0
    %v473 = vadd.f32 0.0, %v472
    %474 = vdwg.mxu0
    %v475 = vadd.f32 %v454, %v473
    %v476 = vxor.u32 %v475, 2147483648
    %v477 = vmul.f32 %v476, 1.442695
    %v478 = vpow.pop %v477
    %v479 = vadd.f32 %v478, 1.0
    %v480 = vrcp.pop %v479
    %v481 = vmul.f32 %v479, %v480
    %v482 = vsub.f32 1.0, %v481
    %v483 = vmul.f32 %v480, %v482
    %v484 = vadd.f32 %v480, %v483
    %vm485 = vweird.f32 %v479
    %vm486 = vweird.f32 %v480
    %vm487 = vmor %vm485, %vm486
    %v488 = vsel %vm487, %v480, %v484
    %v489 = vand.u32 2147483647, %v479
    %vm490 = vcmp.eq.f32.partialorder %v489, 8.507059e+37
    %v491 = vand.u32 %v479, 2147483648
    %v492 = vor.u32 1.1754944e-38, %v491
    %v493 = vsel %vm490, %v492, %v488
    %v494 = vmul.f32 1.0, %v493
    %v495 = vmul.f32 %v426, 0.0
    %v496 = vmul.f32 %v383, %v451
    %v497 = vadd.f32 %v495, %v496
    %v498 = vtanh.pop %v497
    %v499 = vmul.f32 %v494, %v498
    %s500 = scalar_lea.vmem [#allocation2], 8
    %v501 = vld [vmem:[%s500] sm:$0xff]
    %v503 = vsel %vm132, %v499, 0
    %505 = vmatpush.msra.mxu0 0.0
    %506 = vmatpush.msra.mxu0 0.0
    %507 = vmatpush.msra.mxu0 0.0
    %508 = vmatpush.msra.mxu0 0.0
    %509 = vmatpush.msra.mxu0 0.0
    %510 = vmatpush.msra.mxu0 0.0
    %511 = vmatpush.msra.mxu0 0.0
    %512 = vmatpush.msra.mxu0 0.0
    %513 = vmatpush.msra.mxu0 0.0
    %514 = vmatpush.msra.mxu0 0.0
    %515 = vmatpush.msra.mxu0 0.0
    %516 = vmatpush.msra.mxu0 0.0
    %517 = vmatpush.msra.mxu0 %v324
    %518 = vmatpush.msra.mxu0 %v323
    %519 = vmatpush.msra.mxu0 %v322
    %520 = vmatpush.msra.mxu0 %v321
    %521 = vmatmul.f32.gmra.mxu0 %v503
    %v522 = vpop.f32.mrf.mxu0
    %v523 = vadd.f32 0.0, %v522
    %524 = vdwg.mxu0
    %v525 = vadd.f32 %v501, %v523
    %v526 = vxor.u32 %v525, 2147483648
    %v527 = vmul.f32 %v526, 1.442695
    %v528 = vpow.pop %v527
    %v529 = vadd.f32 %v528, 1.0
    %v530 = vrcp.pop %v529
    %v531 = vmul.f32 %v529, %v530
    %v532 = vsub.f32 1.0, %v531
    %v533 = vmul.f32 %v530, %v532
    %v534 = vadd.f32 %v530, %v533
    %vm535 = vweird.f32 %v529
    %vm536 = vweird.f32 %v530
    %vm537 = vmor %vm535, %vm536
    %v538 = vsel %vm537, %v530, %v534
    %v539 = vand.u32 2147483647, %v529
    %vm540 = vcmp.eq.f32.partialorder %v539, 8.507059e+37
    %v541 = vand.u32 %v529, 2147483648
    %v542 = vor.u32 1.1754944e-38, %v541
    %v543 = vsel %vm540, %v542, %v538
    %v544 = vmul.f32 1.0, %v543
    %s545 = sadd.s32 8, 64
    %s546 = scalar_lea.vmem [#allocation2], %s545
    %v547 = vld [vmem:[%s546] sm:$0xff]
    %548 = vmatpush.msra.mxu0 0.0
    %549 = vmatpush.msra.mxu0 0.0
    %550 = vmatpush.msra.mxu0 0.0
    %551 = vmatpush.msra.mxu0 0.0
    %552 = vmatpush.msra.mxu0 0.0
    %553 = vmatpush.msra.mxu0 0.0
    %554 = vmatpush.msra.mxu0 0.0
    %555 = vmatpush.msra.mxu0 0.0
    %556 = vmatpush.msra.mxu0 0.0
    %557 = vmatpush.msra.mxu0 0.0
    %558 = vmatpush.msra.mxu0 0.0
    %559 = vmatpush.msra.mxu0 0.0
    %560 = vmatpush.msra.mxu0 %v329
    %561 = vmatpush.msra.mxu0 %v328
    %562 = vmatpush.msra.mxu0 %v327
    %563 = vmatpush.msra.mxu0 %v326
    %564 = vmatmul.f32.gmra.mxu0 %v503
    %v565 = vpop.f32.mrf.mxu0
    %v566 = vadd.f32 0.0, %v565
    %567 = vdwg.mxu0
    %v568 = vadd.f32 %v547, %v566
    %v569 = vxor.u32 %v568, 2147483648
    %v570 = vmul.f32 %v569, 1.442695
    %v571 = vpow.pop %v570
    %v572 = vadd.f32 %v571, 1.0
    %v573 = vrcp.pop %v572
    %v574 = vmul.f32 %v572, %v573
    %v575 = vsub.f32 1.0, %v574
    %v576 = vmul.f32 %v573, %v575
    %v577 = vadd.f32 %v573, %v576
    %vm578 = vweird.f32 %v572
    %vm579 = vweird.f32 %v573
    %vm580 = vmor %vm578, %vm579
    %v581 = vsel %vm580, %v573, %v577
    %v582 = vand.u32 2147483647, %v572
    %vm583 = vcmp.eq.f32.partialorder %v582, 8.507059e+37
    %v584 = vand.u32 %v572, 2147483648
    %v585 = vor.u32 1.1754944e-38, %v584
    %v586 = vsel %vm583, %v585, %v581
    %v587 = vmul.f32 1.0, %v586
    %s588 = sadd.s32 8, 128
    %s589 = scalar_lea.vmem [#allocation2], %s588
    %v590 = vld [vmem:[%s589] sm:$0xff]
    %591 = vmatpush.msra.mxu0 0.0
    %592 = vmatpush.msra.mxu0 0.0
    %593 = vmatpush.msra.mxu0 0.0
    %594 = vmatpush.msra.mxu0 0.0
    %595 = vmatpush.msra.mxu0 0.0
    %596 = vmatpush.msra.mxu0 0.0
    %597 = vmatpush.msra.mxu0 0.0
    %598 = vmatpush.msra.mxu0 0.0
    %599 = vmatpush.msra.mxu0 0.0
    %600 = vmatpush.msra.mxu0 0.0
    %601 = vmatpush.msra.mxu0 0.0
    %602 = vmatpush.msra.mxu0 0.0
    %603 = vmatpush.msra.mxu0 %v334
    %604 = vmatpush.msra.mxu0 %v333
    %605 = vmatpush.msra.mxu0 %v332
    %606 = vmatpush.msra.mxu0 %v331
    %607 = vmatmul.f32.gmra.mxu0 %v503
    %v608 = vpop.f32.mrf.mxu0
    %v609 = vadd.f32 0.0, %v608
    %610 = vdwg.mxu0
    %v611 = vadd.f32 %v590, %v609
    %v612 = vtanh.pop %v611
    %s613 = sadd.s32 8, 192
    %s614 = scalar_lea.vmem [#allocation2], %s613
    %v615 = vld [vmem:[%s614] sm:$0xff]
    %616 = vmatpush.msra.mxu0 0.0
    %617 = vmatpush.msra.mxu0 0.0
    %618 = vmatpush.msra.mxu0 0.0
    %619 = vmatpush.msra.mxu0 0.0
    %620 = vmatpush.msra.mxu0 0.0
    %621 = vmatpush.msra.mxu0 0.0
    %622 = vmatpush.msra.mxu0 0.0
    %623 = vmatpush.msra.mxu0 0.0
    %624 = vmatpush.msra.mxu0 0.0
    %625 = vmatpush.msra.mxu0 0.0
    %626 = vmatpush.msra.mxu0 0.0
    %627 = vmatpush.msra.mxu0 0.0
    %628 = vmatpush.msra.mxu0 %v339
    %629 = vmatpush.msra.mxu0 %v338
    %630 = vmatpush.msra.mxu0 %v337
    %631 = vmatpush.msra.mxu0 %v336
    %632 = vmatmul.f32.gmra.mxu0 %v503
    %v633 = vpop.f32.mrf.mxu0
    %v634 = vadd.f32 0.0, %v633
    %635 = vdwg.mxu0
    %v636 = vadd.f32 %v615, %v634
    %v637 = vxor.u32 %v636, 2147483648
    %v638 = vmul.f32 %v637, 1.442695
    %v639 = vpow.pop %v638
    %v640 = vadd.f32 %v639, 1.0
    %v641 = vrcp.pop %v640
    %v642 = vmul.f32 %v640, %v641
    %v643 = vsub.f32 1.0, %v642
    %v644 = vmul.f32 %v641, %v643
    %v645 = vadd.f32 %v641, %v644
    %vm646 = vweird.f32 %v640
    %vm647 = vweird.f32 %v641
    %vm648 = vmor %vm646, %vm647
    %v649 = vsel %vm648, %v641, %v645
    %v650 = vand.u32 2147483647, %v640
    %vm651 = vcmp.eq.f32.partialorder %v650, 8.507059e+37
    %v652 = vand.u32 %v640, 2147483648
    %v653 = vor.u32 1.1754944e-38, %v652
    %v654 = vsel %vm651, %v653, %v649
    %v655 = vmul.f32 1.0, %v654
    %v656 = vmul.f32 %v587, %v497
    %v657 = vmul.f32 %v544, %v612
    %v658 = vadd.f32 %v656, %v657
    %v659 = vtanh.pop %v658
    %v660 = vmul.f32 %v655, %v659
    %s661 = scalar_lea.vmem [#allocation2], 16
    %v662 = vld [vmem:[%s661] sm:$0xff]
    %v664 = vsel %vm132, %v660, 0
    %666 = vmatpush.msra.mxu0 0.0
    %667 = vmatpush.msra.mxu0 0.0
    %668 = vmatpush.msra.mxu0 0.0
    %669 = vmatpush.msra.mxu0 0.0
    %670 = vmatpush.msra.mxu0 0.0
    %671 = vmatpush.msra.mxu0 0.0
    %672 = vmatpush.msra.mxu0 0.0
    %673 = vmatpush.msra.mxu0 0.0
    %674 = vmatpush.msra.mxu0 0.0
    %675 = vmatpush.msra.mxu0 0.0
    %676 = vmatpush.msra.mxu0 0.0
    %677 = vmatpush.msra.mxu0 0.0
    %678 = vmatpush.msra.mxu0 %v324
    %679 = vmatpush.msra.mxu0 %v323
    %680 = vmatpush.msra.mxu0 %v322
    %681 = vmatpush.msra.mxu0 %v321
    %682 = vmatmul.f32.gmra.mxu0 %v664
    %v683 = vpop.f32.mrf.mxu0
    %v684 = vadd.f32 0.0, %v683
    %685 = vdwg.mxu0
    %v686 = vadd.f32 %v662, %v684
    %v687 = vxor.u32 %v686, 2147483648
    %v688 = vmul.f32 %v687, 1.442695
    %v689 = vpow.pop %v688
    %v690 = vadd.f32 %v689, 1.0
    %v691 = vrcp.pop %v690
    %v692 = vmul.f32 %v690, %v691
    %v693 = vsub.f32 1.0, %v692
    %v694 = vmul.f32 %v691, %v693
    %v695 = vadd.f32 %v691, %v694
    %vm696 = vweird.f32 %v690
    %vm697 = vweird.f32 %v691
    %vm698 = vmor %vm696, %vm697
    %v699 = vsel %vm698, %v691, %v695
    %v700 = vand.u32 2147483647, %v690
    %vm701 = vcmp.eq.f32.partialorder %v700, 8.507059e+37
    %v702 = vand.u32 %v690, 2147483648
    %v703 = vor.u32 1.1754944e-38, %v702
    %v704 = vsel %vm701, %v703, %v699
    %v705 = vmul.f32 1.0, %v704
    %s706 = sadd.s32 16, 64
    %s707 = scalar_lea.vmem [#allocation2], %s706
    %v708 = vld [vmem:[%s707] sm:$0xff]
    %709 = vmatpush.msra.mxu0 0.0
    %710 = vmatpush.msra.mxu0 0.0
    %711 = vmatpush.msra.mxu0 0.0
    %712 = vmatpush.msra.mxu0 0.0
    %713 = vmatpush.msra.mxu0 0.0
    %714 = vmatpush.msra.mxu0 0.0
    %715 = vmatpush.msra.mxu0 0.0
    %716 = vmatpush.msra.mxu0 0.0
    %717 = vmatpush.msra.mxu0 0.0
    %718 = vmatpush.msra.mxu0 0.0
    %719 = vmatpush.msra.mxu0 0.0
    %720 = vmatpush.msra.mxu0 0.0
    %721 = vmatpush.msra.mxu0 %v329
    %722 = vmatpush.msra.mxu0 %v328
    %723 = vmatpush.msra.mxu0 %v327
    %724 = vmatpush.msra.mxu0 %v326
    %725 = vmatmul.f32.gmra.mxu0 %v664
    %v726 = vpop.f32.mrf.mxu0
    %v727 = vadd.f32 0.0, %v726
    %728 = vdwg.mxu0
    %v729 = vadd.f32 %v708, %v727
    %v730 = vxor.u32 %v729, 2147483648
    %v731 = vmul.f32 %v730, 1.442695
    %v732 = vpow.pop %v731
    %v733 = vadd.f32 %v732, 1.0
    %v734 = vrcp.pop %v733
    %v735 = vmul.f32 %v733, %v734
    %v736 = vsub.f32 1.0, %v735
    %v737 = vmul.f32 %v734, %v736
    %v738 = vadd.f32 %v734, %v737
    %vm739 = vweird.f32 %v733
    %vm740 = vweird.f32 %v734
    %vm741 = vmor %vm739, %vm740
    %v742 = vsel %vm741, %v734, %v738
    %v743 = vand.u32 2147483647, %v733
    %vm744 = vcmp.eq.f32.partialorder %v743, 8.507059e+37
    %v745 = vand.u32 %v733, 2147483648
    %v746 = vor.u32 1.1754944e-38, %v745
    %v747 = vsel %vm744, %v746, %v742
    %v748 = vmul.f32 1.0, %v747
    %s749 = sadd.s32 16, 128
    %s750 = scalar_lea.vmem [#allocation2], %s749
    %v751 = vld [vmem:[%s750] sm:$0xff]
    %752 = vmatpush.msra.mxu0 0.0
    %753 = vmatpush.msra.mxu0 0.0
    %754 = vmatpush.msra.mxu0 0.0
    %755 = vmatpush.msra.mxu0 0.0
    %756 = vmatpush.msra.mxu0 0.0
    %757 = vmatpush.msra.mxu0 0.0
    %758 = vmatpush.msra.mxu0 0.0
    %759 = vmatpush.msra.mxu0 0.0
    %760 = vmatpush.msra.mxu0 0.0
    %761 = vmatpush.msra.mxu0 0.0
    %762 = vmatpush.msra.mxu0 0.0
    %763 = vmatpush.msra.mxu0 0.0
    %764 = vmatpush.msra.mxu0 %v334
    %765 = vmatpush.msra.mxu0 %v333
    %766 = vmatpush.msra.mxu0 %v332
    %767 = vmatpush.msra.mxu0 %v331
    %768 = vmatmul.f32.gmra.mxu0 %v664
    %v769 = vpop.f32.mrf.mxu0
    %v770 = vadd.f32 0.0, %v769
    %771 = vdwg.mxu0
    %v772 = vadd.f32 %v751, %v770
    %v773 = vtanh.pop %v772
    %s774 = sadd.s32 16, 192
    %s775 = scalar_lea.vmem [#allocation2], %s774
    %v776 = vld [vmem:[%s775] sm:$0xff]
    %777 = vmatpush.msra.mxu0 0.0
    %778 = vmatpush.msra.mxu0 0.0
    %779 = vmatpush.msra.mxu0 0.0
    %780 = vmatpush.msra.mxu0 0.0
    %781 = vmatpush.msra.mxu0 0.0
    %782 = vmatpush.msra.mxu0 0.0
    %783 = vmatpush.msra.mxu0 0.0
    %784 = vmatpush.msra.mxu0 0.0
    %785 = vmatpush.msra.mxu0 0.0
    %786 = vmatpush.msra.mxu0 0.0
    %787 = vmatpush.msra.mxu0 0.0
    %788 = vmatpush.msra.mxu0 0.0
    %789 = vmatpush.msra.mxu0 %v339
    %790 = vmatpush.msra.mxu0 %v338
    %791 = vmatpush.msra.mxu0 %v337
    %792 = vmatpush.msra.mxu0 %v336
    %793 = vmatmul.f32.gmra.mxu0 %v664
    %v794 = vpop.f32.mrf.mxu0
    %v795 = vadd.f32 0.0, %v794
    %796 = vdwg.mxu0
    %v797 = vadd.f32 %v776, %v795
    %v798 = vxor.u32 %v797, 2147483648
    %v799 = vmul.f32 %v798, 1.442695
    %v800 = vpow.pop %v799
    %v801 = vadd.f32 %v800, 1.0
    %v802 = vrcp.pop %v801
    %v803 = vmul.f32 %v801, %v802
    %v804 = vsub.f32 1.0, %v803
    %v805 = vmul.f32 %v802, %v804
    %v806 = vadd.f32 %v802, %v805
    %vm807 = vweird.f32 %v801
    %vm808 = vweird.f32 %v802
    %vm809 = vmor %vm807, %vm808
    %v810 = vsel %vm809, %v802, %v806
    %v811 = vand.u32 2147483647, %v801
    %vm812 = vcmp.eq.f32.partialorder %v811, 8.507059e+37
    %v813 = vand.u32 %v801, 2147483648
    %v814 = vor.u32 1.1754944e-38, %v813
    %v815 = vsel %vm812, %v814, %v810
    %v816 = vmul.f32 1.0, %v815
    %v817 = vmul.f32 %v748, %v658
    %v818 = vmul.f32 %v705, %v773
    %v819 = vadd.f32 %v817, %v818
    %v820 = vtanh.pop %v819
    %v821 = vmul.f32 %v816, %v820
    %s822 = scalar_lea.vmem [#allocation2], 24
    %v823 = vld [vmem:[%s822] sm:$0xff]
    %v825 = vsel %vm132, %v821, 0
    %827 = vmatpush.msra.mxu0 0.0
    %828 = vmatpush.msra.mxu0 0.0
    %829 = vmatpush.msra.mxu0 0.0
    %830 = vmatpush.msra.mxu0 0.0
    %831 = vmatpush.msra.mxu0 0.0
    %832 = vmatpush.msra.mxu0 0.0
    %833 = vmatpush.msra.mxu0 0.0
    %834 = vmatpush.msra.mxu0 0.0
    %835 = vmatpush.msra.mxu0 0.0
    %836 = vmatpush.msra.mxu0 0.0
    %837 = vmatpush.msra.mxu0 0.0
    %838 = vmatpush.msra.mxu0 0.0
    %839 = vmatpush.msra.mxu0 %v324
    %840 = vmatpush.msra.mxu0 %v323
    %841 = vmatpush.msra.mxu0 %v322
    %842 = vmatpush.msra.mxu0 %v321
    %843 = vmatmul.f32.gmra.mxu0 %v825
    %v844 = vpop.f32.mrf.mxu0
    %v845 = vadd.f32 0.0, %v844
    %846 = vdwg.mxu0
    %v847 = vadd.f32 %v823, %v845
    %v848 = vxor.u32 %v847, 2147483648
    %v849 = vmul.f32 %v848, 1.442695
    %v850 = vpow.pop %v849
    %v851 = vadd.f32 %v850, 1.0
    %v852 = vrcp.pop %v851
    %v853 = vmul.f32 %v851, %v852
    %v854 = vsub.f32 1.0, %v853
    %v855 = vmul.f32 %v852, %v854
    %v856 = vadd.f32 %v852, %v855
    %vm857 = vweird.f32 %v851
    %vm858 = vweird.f32 %v852
    %vm859 = vmor %vm857, %vm858
    %v860 = vsel %vm859, %v852, %v856
    %v861 = vand.u32 2147483647, %v851
    %vm862 = vcmp.eq.f32.partialorder %v861, 8.507059e+37
    %v863 = vand.u32 %v851, 2147483648
    %v864 = vor.u32 1.1754944e-38, %v863
    %v865 = vsel %vm862, %v864, %v860
    %v866 = vmul.f32 1.0, %v865
    %s867 = sadd.s32 24, 64
    %s868 = scalar_lea.vmem [#allocation2], %s867
    %v869 = vld [vmem:[%s868] sm:$0xff]
    %870 = vmatpush.msra.mxu0 0.0
    %871 = vmatpush.msra.mxu0 0.0
    %872 = vmatpush.msra.mxu0 0.0
    %873 = vmatpush.msra.mxu0 0.0
    %874 = vmatpush.msra.mxu0 0.0
    %875 = vmatpush.msra.mxu0 0.0
    %876 = vmatpush.msra.mxu0 0.0
    %877 = vmatpush.msra.mxu0 0.0
    %878 = vmatpush.msra.mxu0 0.0
    %879 = vmatpush.msra.mxu0 0.0
    %880 = vmatpush.msra.mxu0 0.0
    %881 = vmatpush.msra.mxu0 0.0
    %882 = vmatpush.msra.mxu0 %v329
    %883 = vmatpush.msra.mxu0 %v328
    %884 = vmatpush.msra.mxu0 %v327
    %885 = vmatpush.msra.mxu0 %v326
    %886 = vmatmul.f32.gmra.mxu0 %v825
    %v887 = vpop.f32.mrf.mxu0
    %v888 = vadd.f32 0.0, %v887
    %889 = vdwg.mxu0
    %v890 = vadd.f32 %v869, %v888
    %v891 = vxor.u32 %v890, 2147483648
    %v892 = vmul.f32 %v891, 1.442695
    %v893 = vpow.pop %v892
    %v894 = vadd.f32 %v893, 1.0
    %v895 = vrcp.pop %v894
    %v896 = vmul.f32 %v894, %v895
    %v897 = vsub.f32 1.0, %v896
    %v898 = vmul.f32 %v895, %v897
    %v899 = vadd.f32 %v895, %v898
    %vm900 = vweird.f32 %v894
    %vm901 = vweird.f32 %v895
    %vm902 = vmor %vm900, %vm901
    %v903 = vsel %vm902, %v895, %v899
    %v904 = vand.u32 2147483647, %v894
    %vm905 = vcmp.eq.f32.partialorder %v904, 8.507059e+37
    %v906 = vand.u32 %v894, 2147483648
    %v907 = vor.u32 1.1754944e-38, %v906
    %v908 = vsel %vm905, %v907, %v903
    %v909 = vmul.f32 1.0, %v908
    %s910 = sadd.s32 24, 128
    %s911 = scalar_lea.vmem [#allocation2], %s910
    %v912 = vld [vmem:[%s911] sm:$0xff]
    %913 = vmatpush.msra.mxu0 0.0
    %914 = vmatpush.msra.mxu0 0.0
    %915 = vmatpush.msra.mxu0 0.0
    %916 = vmatpush.msra.mxu0 0.0
    %917 = vmatpush.msra.mxu0 0.0
    %918 = vmatpush.msra.mxu0 0.0
    %919 = vmatpush.msra.mxu0 0.0
    %920 = vmatpush.msra.mxu0 0.0
    %921 = vmatpush.msra.mxu0 0.0
    %922 = vmatpush.msra.mxu0 0.0
    %923 = vmatpush.msra.mxu0 0.0
    %924 = vmatpush.msra.mxu0 0.0
    %925 = vmatpush.msra.mxu0 %v334
    %926 = vmatpush.msra.mxu0 %v333
    %927 = vmatpush.msra.mxu0 %v332
    %928 = vmatpush.msra.mxu0 %v331
    %929 = vmatmul.f32.gmra.mxu0 %v825
    %v930 = vpop.f32.mrf.mxu0
    %v931 = vadd.f32 0.0, %v930
    %932 = vdwg.mxu0
    %v933 = vadd.f32 %v912, %v931
    %v934 = vtanh.pop %v933
    %s935 = sadd.s32 24, 192
    %s936 = scalar_lea.vmem [#allocation2], %s935
    %v937 = vld [vmem:[%s936] sm:$0xff]
    %938 = vmatpush.msra.mxu0 0.0
    %939 = vmatpush.msra.mxu0 0.0
    %940 = vmatpush.msra.mxu0 0.0
    %941 = vmatpush.msra.mxu0 0.0
    %942 = vmatpush.msra.mxu0 0.0
    %943 = vmatpush.msra.mxu0 0.0
    %944 = vmatpush.msra.mxu0 0.0
    %945 = vmatpush.msra.mxu0 0.0
    %946 = vmatpush.msra.mxu0 0.0
    %947 = vmatpush.msra.mxu0 0.0
    %948 = vmatpush.msra.mxu0 0.0
    %949 = vmatpush.msra.mxu0 0.0
    %950 = vmatpush.msra.mxu0 %v339
    %951 = vmatpush.msra.mxu0 %v338
    %952 = vmatpush.msra.mxu0 %v337
    %953 = vmatpush.msra.mxu0 %v336
    %954 = vmatmul.f32.gmra.mxu0 %v825
    %v955 = vpop.f32.mrf.mxu0
    %v956 = vadd.f32 0.0, %v955
    %957 = vdwg.mxu0
    %v958 = vadd.f32 %v937, %v956
    %v959 = vxor.u32 %v958, 2147483648
    %v960 = vmul.f32 %v959, 1.442695
    %v961 = vpow.pop %v960
    %v962 = vadd.f32 %v961, 1.0
    %v963 = vrcp.pop %v962
    %v964 = vmul.f32 %v962, %v963
    %v965 = vsub.f32 1.0, %v964
    %v966 = vmul.f32 %v963, %v965
    %v967 = vadd.f32 %v963, %v966
    %vm968 = vweird.f32 %v962
    %vm969 = vweird.f32 %v963
    %vm970 = vmor %vm968, %vm969
    %v971 = vsel %vm970, %v963, %v967
    %v972 = vand.u32 2147483647, %v962
    %vm973 = vcmp.eq.f32.partialorder %v972, 8.507059e+37
    %v974 = vand.u32 %v962, 2147483648
    %v975 = vor.u32 1.1754944e-38, %v974
    %v976 = vsel %vm973, %v975, %v971
    %v977 = vmul.f32 1.0, %v976
    %v978 = vmul.f32 %v909, %v819
    %v979 = vmul.f32 %v866, %v934
    %v980 = vadd.f32 %v978, %v979
    %v981 = vtanh.pop %v980
    %v982 = vmul.f32 %v977, %v981
    %s983 = scalar_lea.vmem [#allocation2], 32
    %v984 = vld [vmem:[%s983] sm:$0xff]
    %v986 = vsel %vm132, %v982, 0
    %988 = vmatpush.msra.mxu0 0.0
    %989 = vmatpush.msra.mxu0 0.0
    %990 = vmatpush.msra.mxu0 0.0
    %991 = vmatpush.msra.mxu0 0.0
    %992 = vmatpush.msra.mxu0 0.0
    %993 = vmatpush.msra.mxu0 0.0
    %994 = vmatpush.msra.mxu0 0.0
    %995 = vmatpush.msra.mxu0 0.0
    %996 = vmatpush.msra.mxu0 0.0
    %997 = vmatpush.msra.mxu0 0.0
    %998 = vmatpush.msra.mxu0 0.0
    %999 = vmatpush.msra.mxu0 0.0
    %1000 = vmatpush.msra.mxu0 %v324
    %1001 = vmatpush.msra.mxu0 %v323
    %1002 = vmatpush.msra.mxu0 %v322
    %1003 = vmatpush.msra.mxu0 %v321
    %1004 = vmatmul.f32.gmra.mxu0 %v986
    %v1005 = vpop.f32.mrf.mxu0
    %v1006 = vadd.f32 0.0, %v1005
    %1007 = vdwg.mxu0
    %v1008 = vadd.f32 %v984, %v1006
    %v1009 = vxor.u32 %v1008, 2147483648
    %v1010 = vmul.f32 %v1009, 1.442695
    %v1011 = vpow.pop %v1010
    %v1012 = vadd.f32 %v1011, 1.0
    %v1013 = vrcp.pop %v1012
    %v1014 = vmul.f32 %v1012, %v1013
    %v1015 = vsub.f32 1.0, %v1014
    %v1016 = vmul.f32 %v1013, %v1015
    %v1017 = vadd.f32 %v1013, %v1016
    %vm1018 = vweird.f32 %v1012
    %vm1019 = vweird.f32 %v1013
    %vm1020 = vmor %vm1018, %vm1019
    %v1021 = vsel %vm1020, %v1013, %v1017
    %v1022 = vand.u32 2147483647, %v1012
    %vm1023 = vcmp.eq.f32.partialorder %v1022, 8.507059e+37
    %v1024 = vand.u32 %v1012, 2147483648
    %v1025 = vor.u32 1.1754944e-38, %v1024
    %v1026 = vsel %vm1023, %v1025, %v1021
    %v1027 = vmul.f32 1.0, %v1026
    %s1028 = sadd.s32 32, 64
    %s1029 = scalar_lea.vmem [#allocation2], %s1028
    %v1030 = vld [vmem:[%s1029] sm:$0xff]
    %1031 = vmatpush.msra.mxu0 0.0
    %1032 = vmatpush.msra.mxu0 0.0
    %1033 = vmatpush.msra.mxu0 0.0
    %1034 = vmatpush.msra.mxu0 0.0
    %1035 = vmatpush.msra.mxu0 0.0
    %1036 = vmatpush.msra.mxu0 0.0
    %1037 = vmatpush.msra.mxu0 0.0
    %1038 = vmatpush.msra.mxu0 0.0
    %1039 = vmatpush.msra.mxu0 0.0
    %1040 = vmatpush.msra.mxu0 0.0
    %1041 = vmatpush.msra.mxu0 0.0
    %1042 = vmatpush.msra.mxu0 0.0
    %1043 = vmatpush.msra.mxu0 %v329
    %1044 = vmatpush.msra.mxu0 %v328
    %1045 = vmatpush.msra.mxu0 %v327
    %1046 = vmatpush.msra.mxu0 %v326
    %1047 = vmatmul.f32.gmra.mxu0 %v986
    %v1048 = vpop.f32.mrf.mxu0
    %v1049 = vadd.f32 0.0, %v1048
    %1050 = vdwg.mxu0
    %v1051 = vadd.f32 %v1030, %v1049
    %v1052 = vxor.u32 %v1051, 2147483648
    %v1053 = vmul.f32 %v1052, 1.442695
    %v1054 = vpow.pop %v1053
    %v1055 = vadd.f32 %v1054, 1.0
    %v1056 = vrcp.pop %v1055
    %v1057 = vmul.f32 %v1055, %v1056
    %v1058 = vsub.f32 1.0, %v1057
    %v1059 = vmul.f32 %v1056, %v1058
    %v1060 = vadd.f32 %v1056, %v1059
    %vm1061 = vweird.f32 %v1055
    %vm1062 = vweird.f32 %v1056
    %vm1063 = vmor %vm1061, %vm1062
    %v1064 = vsel %vm1063, %v1056, %v1060
    %v1065 = vand.u32 2147483647, %v1055
    %vm1066 = vcmp.eq.f32.partialorder %v1065, 8.507059e+37
    %v1067 = vand.u32 %v1055, 2147483648
    %v1068 = vor.u32 1.1754944e-38, %v1067
    %v1069 = vsel %vm1066, %v1068, %v1064
    %v1070 = vmul.f32 1.0, %v1069
    %s1071 = sadd.s32 32, 128
    %s1072 = scalar_lea.vmem [#allocation2], %s1071
    %v1073 = vld [vmem:[%s1072] sm:$0xff]
    %1074 = vmatpush.msra.mxu0 0.0
    %1075 = vmatpush.msra.mxu0 0.0
    %1076 = vmatpush.msra.mxu0 0.0
    %1077 = vmatpush.msra.mxu0 0.0
    %1078 = vmatpush.msra.mxu0 0.0
    %1079 = vmatpush.msra.mxu0 0.0
    %1080 = vmatpush.msra.mxu0 0.0
    %1081 = vmatpush.msra.mxu0 0.0
    %1082 = vmatpush.msra.mxu0 0.0
    %1083 = vmatpush.msra.mxu0 0.0
    %1084 = vmatpush.msra.mxu0 0.0
    %1085 = vmatpush.msra.mxu0 0.0
    %1086 = vmatpush.msra.mxu0 %v334
    %1087 = vmatpush.msra.mxu0 %v333
    %1088 = vmatpush.msra.mxu0 %v332
    %1089 = vmatpush.msra.mxu0 %v331
    %1090 = vmatmul.f32.gmra.mxu0 %v986
    %v1091 = vpop.f32.mrf.mxu0
    %v1092 = vadd.f32 0.0, %v1091
    %1093 = vdwg.mxu0
    %v1094 = vadd.f32 %v1073, %v1092
    %v1095 = vtanh.pop %v1094
    %s1096 = sadd.s32 32, 192
    %s1097 = scalar_lea.vmem [#allocation2], %s1096
    %v1098 = vld [vmem:[%s1097] sm:$0xff]
    %1099 = vmatpush.msra.mxu0 0.0
    %1100 = vmatpush.msra.mxu0 0.0
    %1101 = vmatpush.msra.mxu0 0.0
    %1102 = vmatpush.msra.mxu0 0.0
    %1103 = vmatpush.msra.mxu0 0.0
    %1104 = vmatpush.msra.mxu0 0.0
    %1105 = vmatpush.msra.mxu0 0.0
    %1106 = vmatpush.msra.mxu0 0.0
    %1107 = vmatpush.msra.mxu0 0.0
    %1108 = vmatpush.msra.mxu0 0.0
    %1109 = vmatpush.msra.mxu0 0.0
    %1110 = vmatpush.msra.mxu0 0.0
    %1111 = vmatpush.msra.mxu0 %v339
    %1112 = vmatpush.msra.mxu0 %v338
    %1113 = vmatpush.msra.mxu0 %v337
    %1114 = vmatpush.msra.mxu0 %v336
    %1115 = vmatmul.f32.gmra.mxu0 %v986
    %v1116 = vpop.f32.mrf.mxu0
    %v1117 = vadd.f32 0.0, %v1116
    %1118 = vdwg.mxu0
    %v1119 = vadd.f32 %v1098, %v1117
    %v1120 = vxor.u32 %v1119, 2147483648
    %v1121 = vmul.f32 %v1120, 1.442695
    %v1122 = vpow.pop %v1121
    %v1123 = vadd.f32 %v1122, 1.0
    %v1124 = vrcp.pop %v1123
    %v1125 = vmul.f32 %v1123, %v1124
    %v1126 = vsub.f32 1.0, %v1125
    %v1127 = vmul.f32 %v1124, %v1126
    %v1128 = vadd.f32 %v1124, %v1127
    %vm1129 = vweird.f32 %v1123
    %vm1130 = vweird.f32 %v1124
    %vm1131 = vmor %vm1129, %vm1130
    %v1132 = vsel %vm1131, %v1124, %v1128
    %v1133 = vand.u32 2147483647, %v1123
    %vm1134 = vcmp.eq.f32.partialorder %v1133, 8.507059e+37
    %v1135 = vand.u32 %v1123, 2147483648
    %v1136 = vor.u32 1.1754944e-38, %v1135
    %v1137 = vsel %vm1134, %v1136, %v1132
    %v1138 = vmul.f32 1.0, %v1137
    %v1139 = vmul.f32 %v1070, %v980
    %v1140 = vmul.f32 %v1027, %v1095
    %v1141 = vadd.f32 %v1139, %v1140
    %v1142 = vtanh.pop %v1141
    %v1143 = vmul.f32 %v1138, %v1142
    %s1144 = scalar_lea.vmem [#allocation2], 40
    %v1145 = vld [vmem:[%s1144] sm:$0xff]
    %v1147 = vsel %vm132, %v1143, 0
    %1149 = vmatpush.msra.mxu0 0.0
    %1150 = vmatpush.msra.mxu0 0.0
    %1151 = vmatpush.msra.mxu0 0.0
    %1152 = vmatpush.msra.mxu0 0.0
    %1153 = vmatpush.msra.mxu0 0.0
    %1154 = vmatpush.msra.mxu0 0.0
    %1155 = vmatpush.msra.mxu0 0.0
    %1156 = vmatpush.msra.mxu0 0.0
    %1157 = vmatpush.msra.mxu0 0.0
    %1158 = vmatpush.msra.mxu0 0.0
    %1159 = vmatpush.msra.mxu0 0.0
    %1160 = vmatpush.msra.mxu0 0.0
    %1161 = vmatpush.msra.mxu0 %v324
    %1162 = vmatpush.msra.mxu0 %v323
    %1163 = vmatpush.msra.mxu0 %v322
    %1164 = vmatpush.msra.mxu0 %v321
    %1165 = vmatmul.f32.gmra.mxu0 %v1147
    %v1166 = vpop.f32.mrf.mxu0
    %v1167 = vadd.f32 0.0, %v1166
    %1168 = vdwg.mxu0
    %v1169 = vadd.f32 %v1145, %v1167
    %v1170 = vxor.u32 %v1169, 2147483648
    %v1171 = vmul.f32 %v1170, 1.442695
    %v1172 = vpow.pop %v1171
    %v1173 = vadd.f32 %v1172, 1.0
    %v1174 = vrcp.pop %v1173
    %v1175 = vmul.f32 %v1173, %v1174
    %v1176 = vsub.f32 1.0, %v1175
    %v1177 = vmul.f32 %v1174, %v1176
    %v1178 = vadd.f32 %v1174, %v1177
    %vm1179 = vweird.f32 %v1173
    %vm1180 = vweird.f32 %v1174
    %vm1181 = vmor %vm1179, %vm1180
    %v1182 = vsel %vm1181, %v1174, %v1178
    %v1183 = vand.u32 2147483647, %v1173
    %vm1184 = vcmp.eq.f32.partialorder %v1183, 8.507059e+37
    %v1185 = vand.u32 %v1173, 2147483648
    %v1186 = vor.u32 1.1754944e-38, %v1185
    %v1187 = vsel %vm1184, %v1186, %v1182
    %v1188 = vmul.f32 1.0, %v1187
    %s1189 = sadd.s32 40, 64
    %s1190 = scalar_lea.vmem [#allocation2], %s1189
    %v1191 = vld [vmem:[%s1190] sm:$0xff]
    %1192 = vmatpush.msra.mxu0 0.0
    %1193 = vmatpush.msra.mxu0 0.0
    %1194 = vmatpush.msra.mxu0 0.0
    %1195 = vmatpush.msra.mxu0 0.0
    %1196 = vmatpush.msra.mxu0 0.0
    %1197 = vmatpush.msra.mxu0 0.0
    %1198 = vmatpush.msra.mxu0 0.0
    %1199 = vmatpush.msra.mxu0 0.0
    %1200 = vmatpush.msra.mxu0 0.0
    %1201 = vmatpush.msra.mxu0 0.0
    %1202 = vmatpush.msra.mxu0 0.0
    %1203 = vmatpush.msra.mxu0 0.0
    %1204 = vmatpush.msra.mxu0 %v329
    %1205 = vmatpush.msra.mxu0 %v328
    %1206 = vmatpush.msra.mxu0 %v327
    %1207 = vmatpush.msra.mxu0 %v326
    %1208 = vmatmul.f32.gmra.mxu0 %v1147
    %v1209 = vpop.f32.mrf.mxu0
    %v1210 = vadd.f32 0.0, %v1209
    %1211 = vdwg.mxu0
    %v1212 = vadd.f32 %v1191, %v1210
    %v1213 = vxor.u32 %v1212, 2147483648
    %v1214 = vmul.f32 %v1213, 1.442695
    %v1215 = vpow.pop %v1214
    %v1216 = vadd.f32 %v1215, 1.0
    %v1217 = vrcp.pop %v1216
    %v1218 = vmul.f32 %v1216, %v1217
    %v1219 = vsub.f32 1.0, %v1218
    %v1220 = vmul.f32 %v1217, %v1219
    %v1221 = vadd.f32 %v1217, %v1220
    %vm1222 = vweird.f32 %v1216
    %vm1223 = vweird.f32 %v1217
    %vm1224 = vmor %vm1222, %vm1223
    %v1225 = vsel %vm1224, %v1217, %v1221
    %v1226 = vand.u32 2147483647, %v1216
    %vm1227 = vcmp.eq.f32.partialorder %v1226, 8.507059e+37
    %v1228 = vand.u32 %v1216, 2147483648
    %v1229 = vor.u32 1.1754944e-38, %v1228
    %v1230 = vsel %vm1227, %v1229, %v1225
    %v1231 = vmul.f32 1.0, %v1230
    %s1232 = sadd.s32 40, 128
    %s1233 = scalar_lea.vmem [#allocation2], %s1232
    %v1234 = vld [vmem:[%s1233] sm:$0xff]
    %1235 = vmatpush.msra.mxu0 0.0
    %1236 = vmatpush.msra.mxu0 0.0
    %1237 = vmatpush.msra.mxu0 0.0
    %1238 = vmatpush.msra.mxu0 0.0
    %1239 = vmatpush.msra.mxu0 0.0
    %1240 = vmatpush.msra.mxu0 0.0
    %1241 = vmatpush.msra.mxu0 0.0
    %1242 = vmatpush.msra.mxu0 0.0
    %1243 = vmatpush.msra.mxu0 0.0
    %1244 = vmatpush.msra.mxu0 0.0
    %1245 = vmatpush.msra.mxu0 0.0
    %1246 = vmatpush.msra.mxu0 0.0
    %1247 = vmatpush.msra.mxu0 %v334
    %1248 = vmatpush.msra.mxu0 %v333
    %1249 = vmatpush.msra.mxu0 %v332
    %1250 = vmatpush.msra.mxu0 %v331
    %1251 = vmatmul.f32.gmra.mxu0 %v1147
    %v1252 = vpop.f32.mrf.mxu0
    %v1253 = vadd.f32 0.0, %v1252
    %1254 = vdwg.mxu0
    %v1255 = vadd.f32 %v1234, %v1253
    %v1256 = vtanh.pop %v1255
    %s1257 = sadd.s32 40, 192
    %s1258 = scalar_lea.vmem [#allocation2], %s1257
    %v1259 = vld [vmem:[%s1258] sm:$0xff]
    %1260 = vmatpush.msra.mxu0 0.0
    %1261 = vmatpush.msra.mxu0 0.0
    %1262 = vmatpush.msra.mxu0 0.0
    %1263 = vmatpush.msra.mxu0 0.0
    %1264 = vmatpush.msra.mxu0 0.0
    %1265 = vmatpush.msra.mxu0 0.0
    %1266 = vmatpush.msra.mxu0 0.0
    %1267 = vmatpush.msra.mxu0 0.0
    %1268 = vmatpush.msra.mxu0 0.0
    %1269 = vmatpush.msra.mxu0 0.0
    %1270 = vmatpush.msra.mxu0 0.0
    %1271 = vmatpush.msra.mxu0 0.0
    %1272 = vmatpush.msra.mxu0 %v339
    %1273 = vmatpush.msra.mxu0 %v338
    %1274 = vmatpush.msra.mxu0 %v337
    %1275 = vmatpush.msra.mxu0 %v336
    %1276 = vmatmul.f32.gmra.mxu0 %v1147
    %v1277 = vpop.f32.mrf.mxu0
    %v1278 = vadd.f32 0.0, %v1277
    %1279 = vdwg.mxu0
    %v1280 = vadd.f32 %v1259, %v1278
    %v1281 = vxor.u32 %v1280, 2147483648
    %v1282 = vmul.f32 %v1281, 1.442695
    %v1283 = vpow.pop %v1282
    %v1284 = vadd.f32 %v1283, 1.0
    %v1285 = vrcp.pop %v1284
    %v1286 = vmul.f32 %v1284, %v1285
    %v1287 = vsub.f32 1.0, %v1286
    %v1288 = vmul.f32 %v1285, %v1287
    %v1289 = vadd.f32 %v1285, %v1288
    %vm1290 = vweird.f32 %v1284
    %vm1291 = vweird.f32 %v1285
    %vm1292 = vmor %vm1290, %vm1291
    %v1293 = vsel %vm1292, %v1285, %v1289
    %v1294 = vand.u32 2147483647, %v1284
    %vm1295 = vcmp.eq.f32.partialorder %v1294, 8.507059e+37
    %v1296 = vand.u32 %v1284, 2147483648
    %v1297 = vor.u32 1.1754944e-38, %v1296
    %v1298 = vsel %vm1295, %v1297, %v1293
    %v1299 = vmul.f32 1.0, %v1298
    %v1300 = vmul.f32 %v1231, %v1141
    %v1301 = vmul.f32 %v1188, %v1256
    %v1302 = vadd.f32 %v1300, %v1301
    %v1303 = vtanh.pop %v1302
    %v1304 = vmul.f32 %v1299, %v1303
    %s1305 = scalar_lea.vmem [#allocation2], 48
    %v1306 = vld [vmem:[%s1305] sm:$0xff]
    %v1308 = vsel %vm132, %v1304, 0
    %1310 = vmatpush.msra.mxu0 0.0
    %1311 = vmatpush.msra.mxu0 0.0
    %1312 = vmatpush.msra.mxu0 0.0
    %1313 = vmatpush.msra.mxu0 0.0
    %1314 = vmatpush.msra.mxu0 0.0
    %1315 = vmatpush.msra.mxu0 0.0
    %1316 = vmatpush.msra.mxu0 0.0
    %1317 = vmatpush.msra.mxu0 0.0
    %1318 = vmatpush.msra.mxu0 0.0
    %1319 = vmatpush.msra.mxu0 0.0
    %1320 = vmatpush.msra.mxu0 0.0
    %1321 = vmatpush.msra.mxu0 0.0
    %1322 = vmatpush.msra.mxu0 %v324
    %1323 = vmatpush.msra.mxu0 %v323
    %1324 = vmatpush.msra.mxu0 %v322
    %1325 = vmatpush.msra.mxu0 %v321
    %1326 = vmatmul.f32.gmra.mxu0 %v1308
    %v1327 = vpop.f32.mrf.mxu0
    %v1328 = vadd.f32 0.0, %v1327
    %1329 = vdwg.mxu0
    %v1330 = vadd.f32 %v1306, %v1328
    %v1331 = vxor.u32 %v1330, 2147483648
    %v1332 = vmul.f32 %v1331, 1.442695
    %v1333 = vpow.pop %v1332
    %v1334 = vadd.f32 %v1333, 1.0
    %v1335 = vrcp.pop %v1334
    %v1336 = vmul.f32 %v1334, %v1335
    %v1337 = vsub.f32 1.0, %v1336
    %v1338 = vmul.f32 %v1335, %v1337
    %v1339 = vadd.f32 %v1335, %v1338
    %vm1340 = vweird.f32 %v1334
    %vm1341 = vweird.f32 %v1335
    %vm1342 = vmor %vm1340, %vm1341
    %v1343 = vsel %vm1342, %v1335, %v1339
    %v1344 = vand.u32 2147483647, %v1334
    %vm1345 = vcmp.eq.f32.partialorder %v1344, 8.507059e+37
    %v1346 = vand.u32 %v1334, 2147483648
    %v1347 = vor.u32 1.1754944e-38, %v1346
    %v1348 = vsel %vm1345, %v1347, %v1343
    %v1349 = vmul.f32 1.0, %v1348
    %s1350 = sadd.s32 48, 64
    %s1351 = scalar_lea.vmem [#allocation2], %s1350
    %v1352 = vld [vmem:[%s1351] sm:$0xff]
    %1353 = vmatpush.msra.mxu0 0.0
    %1354 = vmatpush.msra.mxu0 0.0
    %1355 = vmatpush.msra.mxu0 0.0
    %1356 = vmatpush.msra.mxu0 0.0
    %1357 = vmatpush.msra.mxu0 0.0
    %1358 = vmatpush.msra.mxu0 0.0
    %1359 = vmatpush.msra.mxu0 0.0
    %1360 = vmatpush.msra.mxu0 0.0
    %1361 = vmatpush.msra.mxu0 0.0
    %1362 = vmatpush.msra.mxu0 0.0
    %1363 = vmatpush.msra.mxu0 0.0
    %1364 = vmatpush.msra.mxu0 0.0
    %1365 = vmatpush.msra.mxu0 %v329
    %1366 = vmatpush.msra.mxu0 %v328
    %1367 = vmatpush.msra.mxu0 %v327
    %1368 = vmatpush.msra.mxu0 %v326
    %1369 = vmatmul.f32.gmra.mxu0 %v1308
    %v1370 = vpop.f32.mrf.mxu0
    %v1371 = vadd.f32 0.0, %v1370
    %1372 = vdwg.mxu0
    %v1373 = vadd.f32 %v1352, %v1371
    %v1374 = vxor.u32 %v1373, 2147483648
    %v1375 = vmul.f32 %v1374, 1.442695
    %v1376 = vpow.pop %v1375
    %v1377 = vadd.f32 %v1376, 1.0
    %v1378 = vrcp.pop %v1377
    %v1379 = vmul.f32 %v1377, %v1378
    %v1380 = vsub.f32 1.0, %v1379
    %v1381 = vmul.f32 %v1378, %v1380
    %v1382 = vadd.f32 %v1378, %v1381
    %vm1383 = vweird.f32 %v1377
    %vm1384 = vweird.f32 %v1378
    %vm1385 = vmor %vm1383, %vm1384
    %v1386 = vsel %vm1385, %v1378, %v1382
    %v1387 = vand.u32 2147483647, %v1377
    %vm1388 = vcmp.eq.f32.partialorder %v1387, 8.507059e+37
    %v1389 = vand.u32 %v1377, 2147483648
    %v1390 = vor.u32 1.1754944e-38, %v1389
    %v1391 = vsel %vm1388, %v1390, %v1386
    %v1392 = vmul.f32 1.0, %v1391
    %s1393 = sadd.s32 48, 128
    %s1394 = scalar_lea.vmem [#allocation2], %s1393
    %v1395 = vld [vmem:[%s1394] sm:$0xff]
    %1396 = vmatpush.msra.mxu0 0.0
    %1397 = vmatpush.msra.mxu0 0.0
    %1398 = vmatpush.msra.mxu0 0.0
    %1399 = vmatpush.msra.mxu0 0.0
    %1400 = vmatpush.msra.mxu0 0.0
    %1401 = vmatpush.msra.mxu0 0.0
    %1402 = vmatpush.msra.mxu0 0.0
    %1403 = vmatpush.msra.mxu0 0.0
    %1404 = vmatpush.msra.mxu0 0.0
    %1405 = vmatpush.msra.mxu0 0.0
    %1406 = vmatpush.msra.mxu0 0.0
    %1407 = vmatpush.msra.mxu0 0.0
    %1408 = vmatpush.msra.mxu0 %v334
    %1409 = vmatpush.msra.mxu0 %v333
    %1410 = vmatpush.msra.mxu0 %v332
    %1411 = vmatpush.msra.mxu0 %v331
    %1412 = vmatmul.f32.gmra.mxu0 %v1308
    %v1413 = vpop.f32.mrf.mxu0
    %v1414 = vadd.f32 0.0, %v1413
    %1415 = vdwg.mxu0
    %v1416 = vadd.f32 %v1395, %v1414
    %v1417 = vtanh.pop %v1416
    %s1418 = sadd.s32 48, 192
    %s1419 = scalar_lea.vmem [#allocation2], %s1418
    %v1420 = vld [vmem:[%s1419] sm:$0xff]
    %1421 = vmatpush.msra.mxu0 0.0
    %1422 = vmatpush.msra.mxu0 0.0
    %1423 = vmatpush.msra.mxu0 0.0
    %1424 = vmatpush.msra.mxu0 0.0
    %1425 = vmatpush.msra.mxu0 0.0
    %1426 = vmatpush.msra.mxu0 0.0
    %1427 = vmatpush.msra.mxu0 0.0
    %1428 = vmatpush.msra.mxu0 0.0
    %1429 = vmatpush.msra.mxu0 0.0
    %1430 = vmatpush.msra.mxu0 0.0
    %1431 = vmatpush.msra.mxu0 0.0
    %1432 = vmatpush.msra.mxu0 0.0
    %1433 = vmatpush.msra.mxu0 %v339
    %1434 = vmatpush.msra.mxu0 %v338
    %1435 = vmatpush.msra.mxu0 %v337
    %1436 = vmatpush.msra.mxu0 %v336
    %1437 = vmatmul.f32.gmra.mxu0 %v1308
    %v1438 = vpop.f32.mrf.mxu0
    %v1439 = vadd.f32 0.0, %v1438
    %1440 = vdwg.mxu0
    %v1441 = vadd.f32 %v1420, %v1439
    %v1442 = vxor.u32 %v1441, 2147483648
    %v1443 = vmul.f32 %v1442, 1.442695
    %v1444 = vpow.pop %v1443
    %v1445 = vadd.f32 %v1444, 1.0
    %v1446 = vrcp.pop %v1445
    %v1447 = vmul.f32 %v1445, %v1446
    %v1448 = vsub.f32 1.0, %v1447
    %v1449 = vmul.f32 %v1446, %v1448
    %v1450 = vadd.f32 %v1446, %v1449
    %vm1451 = vweird.f32 %v1445
    %vm1452 = vweird.f32 %v1446
    %vm1453 = vmor %vm1451, %vm1452
    %v1454 = vsel %vm1453, %v1446, %v1450
    %v1455 = vand.u32 2147483647, %v1445
    %vm1456 = vcmp.eq.f32.partialorder %v1455, 8.507059e+37
    %v1457 = vand.u32 %v1445, 2147483648
    %v1458 = vor.u32 1.1754944e-38, %v1457
    %v1459 = vsel %vm1456, %v1458, %v1454
    %v1460 = vmul.f32 1.0, %v1459
    %v1461 = vmul.f32 %v1392, %v1302
    %v1462 = vmul.f32 %v1349, %v1417
    %v1463 = vadd.f32 %v1461, %v1462
    %v1464 = vtanh.pop %v1463
    %v1465 = vmul.f32 %v1460, %v1464
    %s1466 = scalar_lea.vmem [#allocation2], 56
    %v1467 = vld [vmem:[%s1466] sm:$0xff]
    %v1469 = vsel %vm132, %v1465, 0
    %1471 = vmatpush.msra.mxu0 0.0
    %1472 = vmatpush.msra.mxu0 0.0
    %1473 = vmatpush.msra.mxu0 0.0
    %1474 = vmatpush.msra.mxu0 0.0
    %1475 = vmatpush.msra.mxu0 0.0
    %1476 = vmatpush.msra.mxu0 0.0
    %1477 = vmatpush.msra.mxu0 0.0
    %1478 = vmatpush.msra.mxu0 0.0
    %1479 = vmatpush.msra.mxu0 0.0
    %1480 = vmatpush.msra.mxu0 0.0
    %1481 = vmatpush.msra.mxu0 0.0
    %1482 = vmatpush.msra.mxu0 0.0
    %1483 = vmatpush.msra.mxu0 %v324
    %1484 = vmatpush.msra.mxu0 %v323
    %1485 = vmatpush.msra.mxu0 %v322
    %1486 = vmatpush.msra.mxu0 %v321
    %1487 = vmatmul.f32.gmra.mxu0 %v1469
    %v1488 = vpop.f32.mrf.mxu0
    %v1489 = vadd.f32 0.0, %v1488
    %1490 = vdwg.mxu0
    %v1491 = vadd.f32 %v1467, %v1489
    %v1492 = vxor.u32 %v1491, 2147483648
    %v1493 = vmul.f32 %v1492, 1.442695
    %v1494 = vpow.pop %v1493
    %v1495 = vadd.f32 %v1494, 1.0
    %v1496 = vrcp.pop %v1495
    %v1497 = vmul.f32 %v1495, %v1496
    %v1498 = vsub.f32 1.0, %v1497
    %v1499 = vmul.f32 %v1496, %v1498
    %v1500 = vadd.f32 %v1496, %v1499
    %vm1501 = vweird.f32 %v1495
    %vm1502 = vweird.f32 %v1496
    %vm1503 = vmor %vm1501, %vm1502
    %v1504 = vsel %vm1503, %v1496, %v1500
    %v1505 = vand.u32 2147483647, %v1495
    %vm1506 = vcmp.eq.f32.partialorder %v1505, 8.507059e+37
    %v1507 = vand.u32 %v1495, 2147483648
    %v1508 = vor.u32 1.1754944e-38, %v1507
    %v1509 = vsel %vm1506, %v1508, %v1504
    %v1510 = vmul.f32 1.0, %v1509
    %s1511 = sadd.s32 56, 64
    %s1512 = scalar_lea.vmem [#allocation2], %s1511
    %v1513 = vld [vmem:[%s1512] sm:$0xff]
    %1514 = vmatpush.msra.mxu0 0.0
    %1515 = vmatpush.msra.mxu0 0.0
    %1516 = vmatpush.msra.mxu0 0.0
    %1517 = vmatpush.msra.mxu0 0.0
    %1518 = vmatpush.msra.mxu0 0.0
    %1519 = vmatpush.msra.mxu0 0.0
    %1520 = vmatpush.msra.mxu0 0.0
    %1521 = vmatpush.msra.mxu0 0.0
    %1522 = vmatpush.msra.mxu0 0.0
    %1523 = vmatpush.msra.mxu0 0.0
    %1524 = vmatpush.msra.mxu0 0.0
    %1525 = vmatpush.msra.mxu0 0.0
    %1526 = vmatpush.msra.mxu0 %v329
    %1527 = vmatpush.msra.mxu0 %v328
    %1528 = vmatpush.msra.mxu0 %v327
    %1529 = vmatpush.msra.mxu0 %v326
    %1530 = vmatmul.f32.gmra.mxu0 %v1469
    %v1531 = vpop.f32.mrf.mxu0
    %v1532 = vadd.f32 0.0, %v1531
    %1533 = vdwg.mxu0
    %v1534 = vadd.f32 %v1513, %v1532
    %v1535 = vxor.u32 %v1534, 2147483648
    %v1536 = vmul.f32 %v1535, 1.442695
    %v1537 = vpow.pop %v1536
    %v1538 = vadd.f32 %v1537, 1.0
    %v1539 = vrcp.pop %v1538
    %v1540 = vmul.f32 %v1538, %v1539
    %v1541 = vsub.f32 1.0, %v1540
    %v1542 = vmul.f32 %v1539, %v1541
    %v1543 = vadd.f32 %v1539, %v1542
    %vm1544 = vweird.f32 %v1538
    %vm1545 = vweird.f32 %v1539
    %vm1546 = vmor %vm1544, %vm1545
    %v1547 = vsel %vm1546, %v1539, %v1543
    %v1548 = vand.u32 2147483647, %v1538
    %vm1549 = vcmp.eq.f32.partialorder %v1548, 8.507059e+37
    %v1550 = vand.u32 %v1538, 2147483648
    %v1551 = vor.u32 1.1754944e-38, %v1550
    %v1552 = vsel %vm1549, %v1551, %v1547
    %v1553 = vmul.f32 1.0, %v1552
    %s1554 = sadd.s32 56, 128
    %s1555 = scalar_lea.vmem [#allocation2], %s1554
    %v1556 = vld [vmem:[%s1555] sm:$0xff]
    %1557 = vmatpush.msra.mxu0 0.0
    %1558 = vmatpush.msra.mxu0 0.0
    %1559 = vmatpush.msra.mxu0 0.0
    %1560 = vmatpush.msra.mxu0 0.0
    %1561 = vmatpush.msra.mxu0 0.0
    %1562 = vmatpush.msra.mxu0 0.0
    %1563 = vmatpush.msra.mxu0 0.0
    %1564 = vmatpush.msra.mxu0 0.0
    %1565 = vmatpush.msra.mxu0 0.0
    %1566 = vmatpush.msra.mxu0 0.0
    %1567 = vmatpush.msra.mxu0 0.0
    %1568 = vmatpush.msra.mxu0 0.0
    %1569 = vmatpush.msra.mxu0 %v334
    %1570 = vmatpush.msra.mxu0 %v333
    %1571 = vmatpush.msra.mxu0 %v332
    %1572 = vmatpush.msra.mxu0 %v331
    %1573 = vmatmul.f32.gmra.mxu0 %v1469
    %v1574 = vpop.f32.mrf.mxu0
    %v1575 = vadd.f32 0.0, %v1574
    %1576 = vdwg.mxu0
    %v1577 = vadd.f32 %v1556, %v1575
    %v1578 = vtanh.pop %v1577
    %s1579 = sadd.s32 56, 192
    %s1580 = scalar_lea.vmem [#allocation2], %s1579
    %v1581 = vld [vmem:[%s1580] sm:$0xff]
    %1582 = vmatpush.msra.mxu0 0.0
    %1583 = vmatpush.msra.mxu0 0.0
    %1584 = vmatpush.msra.mxu0 0.0
    %1585 = vmatpush.msra.mxu0 0.0
    %1586 = vmatpush.msra.mxu0 0.0
    %1587 = vmatpush.msra.mxu0 0.0
    %1588 = vmatpush.msra.mxu0 0.0
    %1589 = vmatpush.msra.mxu0 0.0
    %1590 = vmatpush.msra.mxu0 0.0
    %1591 = vmatpush.msra.mxu0 0.0
    %1592 = vmatpush.msra.mxu0 0.0
    %1593 = vmatpush.msra.mxu0 0.0
    %1594 = vmatpush.msra.mxu0 %v339
    %1595 = vmatpush.msra.mxu0 %v338
    %1596 = vmatpush.msra.mxu0 %v337
    %1597 = vmatpush.msra.mxu0 %v336
    %1598 = vmatmul.f32.gmra.mxu0 %v1469
    %v1599 = vpop.f32.mrf.mxu0
    %v1600 = vadd.f32 0.0, %v1599
    %1601 = vdwg.mxu0
    %v1602 = vadd.f32 %v1581, %v1600
    %v1603 = vxor.u32 %v1602, 2147483648
    %v1604 = vmul.f32 %v1603, 1.442695
    %v1605 = vpow.pop %v1604
    %v1606 = vadd.f32 %v1605, 1.0
    %v1607 = vrcp.pop %v1606
    %v1608 = vmul.f32 %v1606, %v1607
    %v1609 = vsub.f32 1.0, %v1608
    %v1610 = vmul.f32 %v1607, %v1609
    %v1611 = vadd.f32 %v1607, %v1610
    %vm1612 = vweird.f32 %v1606
    %vm1613 = vweird.f32 %v1607
    %vm1614 = vmor %vm1612, %vm1613
    %v1615 = vsel %vm1614, %v1607, %v1611
    %v1616 = vand.u32 2147483647, %v1606
    %vm1617 = vcmp.eq.f32.partialorder %v1616, 8.507059e+37
    %v1618 = vand.u32 %v1606, 2147483648
    %v1619 = vor.u32 1.1754944e-38, %v1618
    %v1620 = vsel %vm1617, %v1619, %v1615
    %v1621 = vmul.f32 1.0, %v1620
    %v1622 = vmul.f32 %v1553, %v1463
    %v1623 = vmul.f32 %v1510, %v1578
    %v1624 = vadd.f32 %v1622, %v1623
    %v1625 = vtanh.pop %v1624
    %v1626 = vmul.f32 %v1621, %v1625
    %v1627 = vmax.f32 %v1626, 0.0
    %v1628 = vld [vmem:[%s4] sm:$0xff]
    %v1629 = vld [vmem:[%s4 + $0x8] sm:$0xff]
    %v1630 = vld [vmem:[%s4 + $0x10] sm:$0xff]
    %v1631 = vld [vmem:[%s4 + $0x18] sm:$0xff]
    %v1632 = vld [vmem:[%s5] sm:$0x1]
    %v1634 = vperm.slane %v1632, 0
    %v1637 = vsel %vm132, %v1627, 0
    %1639 = vmatpush.msra.mxu0 0.0
    %1640 = vmatpush.msra.mxu0 0.0
    %1641 = vmatpush.msra.mxu0 0.0
    %1642 = vmatpush.msra.mxu0 0.0
    %1643 = vmatpush.msra.mxu0 0.0
    %1644 = vmatpush.msra.mxu0 0.0
    %1645 = vmatpush.msra.mxu0 0.0
    %1646 = vmatpush.msra.mxu0 0.0
    %1647 = vmatpush.msra.mxu0 0.0
    %1648 = vmatpush.msra.mxu0 0.0
    %1649 = vmatpush.msra.mxu0 0.0
    %1650 = vmatpush.msra.mxu0 0.0
    %1651 = vmatpush.msra.mxu0 %v1631
    %1652 = vmatpush.msra.mxu0 %v1630
    %1653 = vmatpush.msra.mxu0 %v1629
    %1654 = vmatpush.msra.mxu0 %v1628
    %1655 = vmatmul.f32.gmra.mxu0 %v1637
    %v1656 = vpop.f32.mrf.mxu0
    %v1657 = vadd.f32 %v1634, %v1656
    %1658 = vdwg.mxu0
    %v1659 = vld [vmem:[%s6] sm:$0xff]
    %v1660 = vld [vmem:[%s6 + $0x8] sm:$0xff]
    %v1661 = vld [vmem:[%s6 + $0x10] sm:$0xff]
    %v1662 = vld [vmem:[%s6 + $0x18] sm:$0xff]
    %v1663 = vld [vmem:[%s7] sm:$0x1]
    %v1665 = vperm.slane %v1663, 0
    %1667 = vmatpush.msra.mxu0 0.0
    %1668 = vmatpush.msra.mxu0 0.0
    %1669 = vmatpush.msra.mxu0 0.0
    %1670 = vmatpush.msra.mxu0 0.0
    %1671 = vmatpush.msra.mxu0 0.0
    %1672 = vmatpush.msra.mxu0 0.0
    %1673 = vmatpush.msra.mxu0 0.0
    %1674 = vmatpush.msra.mxu0 0.0
    %1675 = vmatpush.msra.mxu0 0.0
    %1676 = vmatpush.msra.mxu0 0.0
    %1677 = vmatpush.msra.mxu0 0.0
    %1678 = vmatpush.msra.mxu0 0.0
    %1679 = vmatpush.msra.mxu0 %v1662
    %1680 = vmatpush.msra.mxu0 %v1661
    %1681 = vmatpush.msra.mxu0 %v1660
    %1682 = vmatpush.msra.mxu0 %v1659
    %1683 = vmatmul.f32.gmra.mxu0 %v1637
    %v1684 = vpop.f32.mrf.mxu0
    %v1685 = vadd.f32 %v1665, %v1684
    %1686 = vdwg.mxu0
    %v1687 = vld [vmem:[%s12] sm:$0xff]
    %v1688 = vmul.f32 %v1685, 0.5
    %v1689 = vmul.f32 %v1688, 1.442695
    %v1690 = vpow.pop %v1689
    %v1691 = vmul.f32 %v1687, %v1690
    %v1692 = vadd.f32 %v1657, %v1691
    %v1693 = vld [vmem:[%s8] sm:$0xff]
    %v1694 = vld [vmem:[%s8 + $0x8] sm:$0xff]
    %v1695 = vld [vmem:[%s9] sm:$0x1]
    %v1697 = vperm.slane %v1695, 0
    %vm1699 = vcmask 130048
    %v1701 = vsel %vm1699, %v1692, 0
    %1703 = vmatpush.msra.mxu0 0.0
    %1704 = vmatpush.msra.mxu0 0.0
    %1705 = vmatpush.msra.mxu0 0.0
    %1706 = vmatpush.msra.mxu0 0.0
    %1707 = vmatpush.msra.mxu0 0.0
    %1708 = vmatpush.msra.mxu0 0.0
    %1709 = vmatpush.msra.mxu0 0.0
    %1710 = vmatpush.msra.mxu0 0.0
    %1711 = vmatpush.msra.mxu0 0.0
    %1712 = vmatpush.msra.mxu0 0.0
    %1713 = vmatpush.msra.mxu0 0.0
    %1714 = vmatpush.msra.mxu0 0.0
    %1715 = vmatpush.msra.mxu0 0.0
    %1716 = vmatpush.msra.mxu0 0.0
    %1717 = vmatpush.msra.mxu0 %v1694
    %1718 = vmatpush.msra.mxu0 %v1693
    %1719 = vmatmul.f32.gmra.mxu0 %v1701
    %v1720 = vpop.f32.mrf.mxu0
    %v1721 = vadd.f32 %v1697, %v1720
    %1722 = vdwg.mxu0
    %v1723 = vmax.f32 %v1721, 0.0
    %v1724 = vld [vmem:[%s10] sm:$0xff]
    %v1725 = vld [vmem:[%s10 + $0x8] sm:$0xff]
    %v1726 = vld [vmem:[%s10 + $0x10] sm:$0xff]
    %v1727 = vld [vmem:[%s10 + $0x18] sm:$0xff]
    %v1728 = vld [vmem:[%s11] sm:$0x1]
    %v1730 = vperm.slane %v1728, 0
    %v1733 = vsel %vm132, %v1723, 0
    %1735 = vmatpush.msra.mxu0 0.0
    %1736 = vmatpush.msra.mxu0 0.0
    %1737 = vmatpush.msra.mxu0 0.0
    %1738 = vmatpush.msra.mxu0 0.0
    %1739 = vmatpush.msra.mxu0 0.0
    %1740 = vmatpush.msra.mxu0 0.0
    %1741 = vmatpush.msra.mxu0 0.0
    %1742 = vmatpush.msra.mxu0 0.0
    %1743 = vmatpush.msra.mxu0 0.0
    %1744 = vmatpush.msra.mxu0 0.0
    %1745 = vmatpush.msra.mxu0 0.0
    %1746 = vmatpush.msra.mxu0 0.0
    %1747 = vmatpush.msra.mxu0 %v1727
    %1748 = vmatpush.msra.mxu0 %v1726
    %1749 = vmatpush.msra.mxu0 %v1725
    %1750 = vmatpush.msra.mxu0 %v1724
    %1751 = vmatmul.f32.gmra.mxu0 %v1733
    %v1752 = vpop.f32.mrf.mxu0
    %v1753 = vadd.f32 %v1730, %v1752
    %1754 = vdwg.mxu0
    %v1755 = vxor.u32 %v1753, 2147483648
    %v1756 = vmul.f32 %v1755, 1.442695
    %v1757 = vpow.pop %v1756
    %v1758 = vadd.f32 %v1757, 1.0
    %v1759 = vrcp.pop %v1758
    %v1760 = vmul.f32 %v1758, %v1759
    %v1761 = vsub.f32 1.0, %v1760
    %v1762 = vmul.f32 %v1759, %v1761
    %v1763 = vadd.f32 %v1759, %v1762
    %vm1764 = vweird.f32 %v1758
    %vm1765 = vweird.f32 %v1759
    %vm1766 = vmor %vm1764, %vm1765
    %v1767 = vsel %vm1766, %v1759, %v1763
    %v1768 = vand.u32 2147483647, %v1758
    %vm1769 = vcmp.eq.f32.partialorder %v1768, 8.507059e+37
    %v1770 = vand.u32 %v1758, 2147483648
    %v1771 = vor.u32 1.1754944e-38, %v1770
    %v1772 = vsel %vm1769, %v1771, %v1767
    %v1773 = vmul.f32 1.0, %v1772
    %1774 = vst.msk [vmem:[%s13] sm:$0xff] %vm62, %v1773
    %1775 = vst.msk [vmem:[#allocation3] sm:$0xff] %vm1699, %v1657
    %1776 = vst.msk [vmem:[#allocation5] sm:$0xff] %vm1699, %v1685
    // Predicated region
    $region54: #{fbvae_forward.1} parent=1 // pred_check
      _
    $region55: #{fbvae_forward.1} parent=1 // pred_check_branch
      %1778 = sbr.rel (0) target = $region57
    $region56: #{fbvae_forward.1} parent=1 // pred_region
      _
    $region57: #{fbvae_forward.1} parent=1 // pred_fallthru
      _
    // Predicated region
    $region58: #{fbvae_forward.1} parent=1 // pred_check
      _
    $region59: #{fbvae_forward.1} parent=1 // pred_check_branch
      %1780 = sbr.rel (0) target = $region61
    $region60: #{fbvae_forward.1} parent=1 // pred_region
      %1782 = vsyncadd [#allocation4], 0
      %s1784 = sshll.u32 [#allocation3], 4
      %s1785 = int_to_ptr.vmem [resolvable:$true] %s1784
      %s1786 = sshll.u32 %s14, 4
      %s1787 = int_to_ptr.hbm [resolvable:$true] %s1786
      %1789 = dma.vmem_to_hbm [thread:$0]  %s1785, 128, %s1787, [#allocation4]
    $region61: #{fbvae_forward.1} parent=1 // pred_fallthru
      _
    // Predicated region
    $region62: #{fbvae_forward.1} parent=1 // pred_check
      _
    $region63: #{fbvae_forward.1} parent=1 // pred_check_branch
      %1791 = sbr.rel (0) target = $region65
    $region64: #{fbvae_forward.1} parent=1 // pred_region
      %1793 = vsyncadd [#allocation6], 0
      %s1795 = sshll.u32 [#allocation5], 4
      %s1796 = int_to_ptr.vmem [resolvable:$true] %s1795
      %s1797 = sshll.u32 %s15, 4
      %s1798 = int_to_ptr.hbm [resolvable:$true] %s1797
      %1800 = dma.vmem_to_hbm [thread:$0]  %s1796, 128, %s1798, [#allocation6]
    $region65: #{fbvae_forward.1} parent=1 // pred_fallthru
      _
    // Predicated region
    $region66: #{fbvae_forward.1} parent=1 // pred_check
      _
    $region67: #{fbvae_forward.1} parent=1 // pred_check_branch
      %1802 = sbr.rel (0) target = $region69
    $region68: #{fbvae_forward.1} parent=1 // pred_region
      _
    $region69: #{fbvae_forward.1} parent=1 // pred_fallthru
      _
    // Predicated region
    $region70: #{fbvae_forward.1} parent=1 // pred_check
      _
    $region71: #{fbvae_forward.1} parent=1 // pred_check_branch
      %1804 = sbr.rel (0) target = $region73
    $region72: #{fbvae_forward.1} parent=1 // pred_region
      %1806 = dma.done [#allocation4], 128
    $region73: #{fbvae_forward.1} parent=1 // pred_fallthru
      _
    // Predicated region
    $region74: #{fbvae_forward.1} parent=1 // pred_check
      _
    $region75: #{fbvae_forward.1} parent=1 // pred_check_branch
      %1808 = sbr.rel (0) target = $region77
    $region76: #{fbvae_forward.1} parent=1 // pred_region
      %1810 = dma.done [#allocation6], 128
    $region77: #{fbvae_forward.1} parent=1 // pred_fallthru
      _
    %1811 = vsyncpa [#allocation4], 1
    %1812 = vsyncpa [#allocation6], 1

</llo_original>
